<compile_context>
chip_gen: v7x
topology: tpu7x:2x2x1
jax: 0.10.0
libtpu: 0.0.40
codegen_flags: <defaults>
</compile_context>

<pallas_src>
import jax
import jax.numpy as jnp
from jax import lax
from jax.experimental import pallas as pl
from jax.experimental.pallas import tpu as pltpu

MAX_LENGTH = 10


def _fused_decode_kernel(
    x_emb_ref,   # (T, H)   embedded tokens for all steps
    h0_ref,      # (1, H)   initial hidden
    enc_ref,     # (S, H)   encoder outputs
    w_hg_ref,    # (H, 4H)  [W_a | W_hh^T] fused same-LHS RHS
    w_ih_x_ref,  # (H, 3H)  GRU input weights, embedded-word half
    w_ih_c_ref,  # (H, 3H)  GRU input weights, context half
    b_ih_ref,    # (1, 3H)
    b_hh_ref,    # (1, 3H)
    w_out_ref,   # (H, Vp)  output projection, lane-padded
    b_out_ref,   # (1, Vp)  padded entries = -1e30
    logp_ref,    # out (T, Vp)  per-step log-probabilities (padded)
    h_out_ref,   # out (1, H)   final hidden
    attn_ref,    # out (T, S)   per-step attention weights
):
    T, H = x_emb_ref.shape

    enc = enc_ref[...]                                                          # (S, H)
    w_hg = w_hg_ref[...]                                                        # (H, 4H)
    b_hh = b_hh_ref[...]                                                        # (1, 3H)

    # ---- Prologue: non-recurrent matmuls, batched (real M for the MXU).
    gi_x_all = (jnp.dot(x_emb_ref[...], w_ih_x_ref[...],
                        preferred_element_type=jnp.float32) + b_ih_ref[...])    # (T, 3H)
    # context_t @ W_ih_c == attn_t @ (enc @ W_ih_c): hoist enc @ W_ih_c out.
    enc_wc = jnp.dot(enc, w_ih_c_ref[...], preferred_element_type=jnp.float32)  # (S, 3H)

    h = h0_ref[...]                                                             # (1, H)
    attn_rows = []
    h_rows = []

    # ---- Fully-unrolled sequential recurrence (T <= MAX_LENGTH).
    for t in range(T):
        # One MXU push for both h @ W_a and h @ W_hh^T.
        hg = jnp.dot(h, w_hg, preferred_element_type=jnp.float32)               # (1, 4H)
        hW = hg[:, 0:H]                                                         # (1, H)
        gh = hg[:, H:4 * H] + b_hh                                              # (1, 3H)

        # Attn('general') scores: <h, W_a enc_s>; the constant <h, b_a> term is
        # dropped because softmax is shift-invariant.
        scores = lax.dot_general(hW, enc, (((1,), (1,)), ((), ())),
                                 preferred_element_type=jnp.float32)            # (1, S)
        m = jnp.max(scores, axis=1, keepdims=True)
        e = jnp.exp(scores - m)
        attn = e / jnp.sum(e, axis=1, keepdims=True)                            # (1, S)
        attn_rows.append(attn)

        # GRU single step (PyTorch gate order r, z, n); context matmul folded
        # into attn @ enc_wc.
        gi = gi_x_all[t:t + 1, :] + jnp.dot(attn, enc_wc,
                                            preferred_element_type=jnp.float32)  # (1, 3H)
        r = jax.nn.sigmoid(gi[:, 0:H] + gh[:, 0:H])
        z = jax.nn.sigmoid(gi[:, H:2 * H] + gh[:, H:2 * H])
        n = jnp.tanh(gi[:, 2 * H:3 * H] + r * gh[:, 2 * H:3 * H])
        h = (1.0 - z) * n + z * h                                               # (1, H)
        h_rows.append(h)

    attn_ref[...] = jnp.concatenate(attn_rows, axis=0)                          # (T, S)
    h_out_ref[...] = h

    # ---- Epilogue: batched output projection + log_softmax (M = T, lane-dense Vp).
    h_all = jnp.concatenate(h_rows, axis=0)                                     # (T, H)
    logits = (jnp.dot(h_all, w_out_ref[...], preferred_element_type=jnp.float32)
              + b_out_ref[...])                                                 # (T, Vp)
    lm = jnp.max(logits, axis=1, keepdims=True)
    shifted = logits - lm
    lse = jnp.log(jnp.sum(jnp.exp(shifted), axis=1, keepdims=True))
    logp_ref[...] = shifted - lse


def init_params(key, hidden_size, output_size):
    """Deterministic parameter init (PyTorch-style uniform ranges)."""
    H, V = hidden_size, output_size
    ks = jax.random.split(key, 10)

    def u(k, shape, fan_in):
        bound = 1.0 / jnp.sqrt(jnp.float32(fan_in))
        return jax.random.uniform(k, shape, jnp.float32, -bound, bound)

    return {
        "embedding": jax.random.normal(ks[0], (V, H), jnp.float32),   # nn.Embedding
        "wa": u(ks[1], (H, H), H),                                    # Attn linear (out, in)
        "ba": u(ks[2], (H,), H),
        "w_ih": u(ks[3], (3 * H, 2 * H), H),                          # GRU weight_ih_l0
        "b_ih": u(ks[4], (3 * H,), H),
        "w_hh": u(ks[5], (3 * H, H), H),                              # GRU weight_hh_l0
        "b_hh": u(ks[6], (3 * H,), H),
        "w_out": u(ks[7], (V, H), H),                                 # nn.Linear(H, V)
        "b_out": u(ks[8], (V,), H),
    }


def _round_up(x, m):
    return ((x + m - 1) // m) * m


def prepare_decoder_params(params):
    """One-time re-layout of PyTorch-style params into kernel layout (hoisted)."""
    H = params["wa"].shape[0]
    V = params["w_out"].shape[0]
    Vp = _round_up(V, 128)                     # lane-dense output projection

    w_ih_t = jnp.transpose(params["w_ih"])                            # (2H, 3H)
    w_hh_t = jnp.transpose(params["w_hh"])                            # (H, 3H)
    # Fused same-LHS RHS: h @ [W_a | W_hh^T] in one push.  (ba is dropped:
    # the <h, b_a> score offset is softmax shift-invariant.)
    w_hg = jnp.concatenate([params["wa"], w_hh_t], axis=1)            # (H, 4H)

    w_out_t = jnp.transpose(params["w_out"])                          # (H, V)
    w_out_p = jnp.zeros((H, Vp), jnp.float32).at[:, :V].set(w_out_t)  # zero-pad cols
    b_out_p = jnp.full((1, Vp), -1e30, jnp.float32).at[0, :V].set(params["b_out"])

    return {
        "embedding": params["embedding"].astype(jnp.float32),         # (V, H)
        "w_hg": w_hg.astype(jnp.float32),                             # (H, 4H)
        "w_ih_x": w_ih_t[:H, :].astype(jnp.float32),                  # (H, 3H)
        "w_ih_c": w_ih_t[H:, :].astype(jnp.float32),                  # (H, 3H)
        "b_ih": params["b_ih"][None, :].astype(jnp.float32),          # (1, 3H)
        "b_hh": params["b_hh"][None, :].astype(jnp.float32),          # (1, 3H)
        "w_out": w_out_p,                                             # (H, Vp)
        "b_out": b_out_p,                                             # (1, Vp)
    }


@jax.jit
def bahdanau_attn_decoder_decode(kparams, word_inputs, last_hidden, encoder_outputs):
    """Fused teacher-forced decode of T steps in a single (grid-less) pallas_call.

    word_inputs:     (T,) int32 token ids (one per decode step)
    last_hidden:     (n_layers=1, 1, H) float32 initial hidden
    encoder_outputs: (S, 1, H) float32
    returns: log_probs (T, V), hidden (1, 1, H) final, attn_weights (T, S)
    """
    T = word_inputs.shape[0]
    H = last_hidden.shape[-1]
    S = encoder_outputs.shape[0]
    V = kparams["embedding"].shape[0]
    Vp = kparams["w_out"].shape[1]

    # Glue: ONE embedding gather for the whole decode + dropout (inference identity).
    x_emb_all = kparams["embedding"][word_inputs].astype(jnp.float32)   # (T, H)
    h0 = last_hidden[-1].astype(jnp.float32)                            # (1, H)
    enc = encoder_outputs[:, 0, :].astype(jnp.float32)                  # (S, H)

    # Advisory cost estimate (tiny, latency-bound kernel).
    H3, H4 = 3 * H, 4 * H
    flops = (2 * T * H * H3 + 2 * S * H * H3            # prologue matmuls
             + T * 2 * (H * H4 + H * S + S * H3)        # recurrence
             + 2 * T * H * Vp)                          # batched output projection
    transcendentals = T * (S + 3 * H + Vp + 1)
    bytes_accessed = 4 * (T * H + 2 * H + S * H + H * H4 + 2 * H * H3 + 2 * H3
                          + H * Vp + Vp + T * Vp + T * S)
    cost = pl.CostEstimate(flops=flops, transcendentals=transcendentals,
                           bytes_accessed=bytes_accessed)

    # No grid: every operand / result is a whole-array VMEM block (one DMA in,
    # one writeback); the T-step recurrence is unrolled inside the kernel.
    logp_p, h_final, attn_all = pl.pallas_call(
        _fused_decode_kernel,
        out_shape=(
            jax.ShapeDtypeStruct((T, Vp), jnp.float32),
            jax.ShapeDtypeStruct((1, H), jnp.float32),
            jax.ShapeDtypeStruct((T, S), jnp.float32),
        ),
        compiler_params=pltpu.CompilerParams(vmem_limit_bytes=32 * 1024 * 1024),
        cost_estimate=cost,
    )(
        x_emb_all, h0, enc,
        kparams["w_hg"], kparams["w_ih_x"], kparams["w_ih_c"],
        kparams["b_ih"], kparams["b_hh"],
        kparams["w_out"], kparams["b_out"],
    )

    return logp_p[:, :V], h_final[None], attn_all


def bahdanau_attn_decoder_step(kparams, word_input, last_hidden, encoder_outputs):
    """Single decode step matching the PyTorch module forward signature.

    returns: log_probs (1, V), hidden (1, 1, H), attn_weights (1, 1, S)
    """
    word_inputs = jnp.reshape(jnp.asarray(word_input, jnp.int32), (1,))
    logp, hidden, attn = bahdanau_attn_decoder_decode(
        kparams, word_inputs, last_hidden, encoder_outputs)
    return logp, hidden, attn[:, None, :]


def _reference_decode(params, word_inputs, last_hidden, encoder_outputs):
    """Pure-JAX per-step reference loop (straightforward math, no reordering)."""
    H = last_hidden.shape[-1]
    enc = encoder_outputs[:, 0, :]
    h = last_hidden[-1]                                               # (1, H)

    logps, hiddens, attns = [], [], []
    for t in range(word_inputs.shape[0]):
        x_emb = params["embedding"][word_inputs[t]][None, :]
        proj = enc @ params["wa"].T + params["ba"]                    # (S, H)
        scores = proj @ h[0]                                          # (S,)
        attn = jax.nn.softmax(scores)
        context = attn[None, :] @ enc                                 # (1, H)

        x = jnp.concatenate([x_emb, context], axis=1)
        gi = x @ params["w_ih"].T + params["b_ih"]
        gh = h @ params["w_hh"].T + params["b_hh"]
        r = jax.nn.sigmoid(gi[:, 0:H] + gh[:, 0:H])
        z = jax.nn.sigmoid(gi[:, H:2 * H] + gh[:, H:2 * H])
        n = jnp.tanh(gi[:, 2 * H:3 * H] + r * gh[:, 2 * H:3 * H])
        h = (1.0 - z) * n + z * h

        logits = h @ params["w_out"].T + params["b_out"]
        logps.append(jax.nn.log_softmax(logits, axis=-1)[0])
        hiddens.append(h)
        attns.append(attn)

    return jnp.stack(logps), jnp.stack(hiddens), jnp.stack(attns)


if __name__ == "__main__":
    hidden_size = 32
    output_size = 64
    seq_len = 8           # <= MAX_LENGTH
    n_layers = 1
    n_steps = 4           # fused decode steps (teacher-forced token sequence)

    key = jax.random.PRNGKey(0)
    k_params, k_h, k_enc, k_tok = jax.random.split(key, 4)

    params = init_params(k_params, hidden_size, output_size)
    kparams = prepare_decoder_params(params)    # one-time kernel-layout weights

    word_inputs = jax.random.randint(k_tok, (n_steps,), 0, output_size, dtype=jnp.int32)
    last_hidden = jax.random.normal(k_h, (n_layers, 1, hidden_size), jnp.float32)
    encoder_outputs = jax.random.normal(k_enc, (seq_len, 1, hidden_size), jnp.float32)

    # Fused multi-step decode: ONE pallas_call for all n_steps tokens.
    logp_seq, hidden_fin, attn_seq = jax.block_until_ready(
        bahdanau_attn_decoder_decode(kparams, word_inputs, last_hidden, encoder_outputs))

    # Single step with the original module interface (T=1 call of the same kernel).
    logp1, hidden1, attn1 = jax.block_until_ready(
        bahdanau_attn_decoder_step(kparams, word_inputs[0], last_hidden, encoder_outputs))

    # Pure-JAX reference.
    logp_r, h_r, attn_r = _reference_decode(params, word_inputs, last_hidden, encoder_outputs)

    assert logp_seq.shape == (n_steps, output_size)
    assert hidden_fin.shape == (n_layers, 1, hidden_size)
    assert attn_seq.shape == (n_steps, seq_len)
    assert jnp.allclose(logp_seq, logp_r, atol=5e-4, rtol=1e-4), "log_probs mismatch"
    assert jnp.allclose(hidden_fin[0], h_r[-1], atol=5e-4, rtol=1e-4), "final hidden mismatch"
    assert jnp.allclose(attn_seq, attn_r, atol=5e-4, rtol=1e-4), "attn_weights mismatch"

    assert logp1.shape == (1, output_size)
    assert hidden1.shape == (n_layers, 1, hidden_size)
    assert attn1.shape == (1, 1, seq_len)
    assert jnp.allclose(logp1, logp_r[0:1], atol=5e-4, rtol=1e-4), "step log_probs mismatch"
    assert jnp.allclose(hidden1[0], h_r[0], atol=5e-4, rtol=1e-4), "step hidden mismatch"

    print("KERNEL_OK")
</pallas_src>

<mosaic_0001>
module attributes {stable_mosaic.version = 11 : i64} {
  func.func @_fused_decode_kernel(%arg0: memref<4x32xf32, #tpu.memory_space<vmem>>, %arg1: memref<1x32xf32, #tpu.memory_space<vmem>>, %arg2: memref<8x32xf32, #tpu.memory_space<vmem>>, %arg3: memref<32x128xf32, #tpu.memory_space<vmem>>, %arg4: memref<32x96xf32, #tpu.memory_space<vmem>>, %arg5: memref<32x96xf32, #tpu.memory_space<vmem>>, %arg6: memref<1x96xf32, #tpu.memory_space<vmem>>, %arg7: memref<1x96xf32, #tpu.memory_space<vmem>>, %arg8: memref<32x128xf32, #tpu.memory_space<vmem>>, %arg9: memref<1x128xf32, #tpu.memory_space<vmem>>, %arg10: memref<4x128xf32, #tpu.memory_space<vmem>>, %arg11: memref<1x32xf32, #tpu.memory_space<vmem>>, %arg12: memref<4x8xf32, #tpu.memory_space<vmem>>) attributes {dimension_semantics = [], scalar_prefetch = 0 : i64, scratch_operands = 0 : i64, tpu.core_type = #tpu.core_type<tc>} {
    %c0 = arith.constant 0 : index
    %c0_0 = arith.constant 0 : index
    %0 = vector.load %arg2[%c0, %c0_0] : memref<8x32xf32, #tpu.memory_space<vmem>>, vector<8x32xf32>
    %c0_1 = arith.constant 0 : index
    %c0_2 = arith.constant 0 : index
    %1 = vector.load %arg3[%c0_1, %c0_2] : memref<32x128xf32, #tpu.memory_space<vmem>>, vector<32x128xf32>
    %c0_3 = arith.constant 0 : index
    %c0_4 = arith.constant 0 : index
    %2 = vector.load %arg7[%c0_3, %c0_4] : memref<1x96xf32, #tpu.memory_space<vmem>>, vector<1x96xf32>
    %c0_5 = arith.constant 0 : index
    %c0_6 = arith.constant 0 : index
    %3 = vector.load %arg0[%c0_5, %c0_6] : memref<4x32xf32, #tpu.memory_space<vmem>>, vector<4x32xf32>
    %c0_7 = arith.constant 0 : index
    %c0_8 = arith.constant 0 : index
    %4 = vector.load %arg4[%c0_7, %c0_8] : memref<32x96xf32, #tpu.memory_space<vmem>>, vector<32x96xf32>
    %cst = arith.constant dense<0.000000e+00> : vector<4x96xf32>
    %5 = tpu.matmul %3, %4, %cst {dimension_numbers = #tpu.dot_dimension_numbers<[1], [0], [0], [1], [0, 0, 1, 1], [], []>} : vector<4x32xf32>, vector<32x96xf32>, vector<4x96xf32> -> vector<4x96xf32>
    %c0_9 = arith.constant 0 : index
    %c0_10 = arith.constant 0 : index
    %6 = vector.load %arg6[%c0_9, %c0_10] : memref<1x96xf32, #tpu.memory_space<vmem>>, vector<1x96xf32>
    %7 = vector.broadcast %6 : vector<1x96xf32> to vector<4x96xf32>
    %8 = arith.addf %5, %7 : vector<4x96xf32>
    %c0_11 = arith.constant 0 : index
    %c0_12 = arith.constant 0 : index
    %9 = vector.load %arg5[%c0_11, %c0_12] : memref<32x96xf32, #tpu.memory_space<vmem>>, vector<32x96xf32>
    %cst_13 = arith.constant dense<0.000000e+00> : vector<8x96xf32>
    %10 = tpu.matmul %0, %9, %cst_13 {dimension_numbers = #tpu.dot_dimension_numbers<[1], [0], [0], [1], [0, 0, 1, 1], [], []>} : vector<8x32xf32>, vector<32x96xf32>, vector<8x96xf32> -> vector<8x96xf32>
    %c0_14 = arith.constant 0 : index
    %c0_15 = arith.constant 0 : index
    %11 = vector.load %arg1[%c0_14, %c0_15] : memref<1x32xf32, #tpu.memory_space<vmem>>, vector<1x32xf32>
    %cst_16 = arith.constant dense<0.000000e+00> : vector<1x128xf32>
    %12 = tpu.matmul %11, %1, %cst_16 {dimension_numbers = #tpu.dot_dimension_numbers<[1], [0], [0], [1], [0, 0, 1, 1], [], []>} : vector<1x32xf32>, vector<32x128xf32>, vector<1x128xf32> -> vector<1x128xf32>
    %13 = vector.extract_strided_slice %12 {offsets = [0, 0], sizes = [1, 32], strides = [1, 1]} : vector<1x128xf32> to vector<1x32xf32>
    %14 = vector.extract_strided_slice %12 {offsets = [0, 32], sizes = [1, 96], strides = [1, 1]} : vector<1x128xf32> to vector<1x96xf32>
    %15 = arith.addf %14, %2 : vector<1x96xf32>
    %cst_17 = arith.constant dense<0.000000e+00> : vector<1x8xf32>
    %16 = tpu.matmul %13, %0, %cst_17 {dimension_numbers = #tpu.dot_dimension_numbers<[1], [1], [0], [0], [0, 0, 1, 0], [], []>} : vector<1x32xf32>, vector<8x32xf32>, vector<1x8xf32> -> vector<1x8xf32>
    %cst_18 = arith.constant dense<0xFF800000> : vector<1xf32>
    %17 = vector.multi_reduction <maximumf>, %16, %cst_18 [1] : vector<1x8xf32> to vector<1xf32>
    %18 = vector.shape_cast %17 : vector<1xf32> to vector<1x1xf32>
    %19 = vector.broadcast %18 : vector<1x1xf32> to vector<1x8xf32>
    %20 = arith.subf %16, %19 : vector<1x8xf32>
    %21 = math.exp %20 : vector<1x8xf32>
    %cst_19 = arith.constant dense<0.000000e+00> : vector<1xf32>
    %22 = vector.multi_reduction <add>, %21, %cst_19 [1] : vector<1x8xf32> to vector<1xf32>
    %23 = vector.shape_cast %22 : vector<1xf32> to vector<1x1xf32>
    %24 = vector.broadcast %23 : vector<1x1xf32> to vector<1x8xf32>
    %25 = arith.divf %21, %24 : vector<1x8xf32>
    %26 = vector.extract_strided_slice %8 {offsets = [0, 0], sizes = [1, 96], strides = [1, 1]} : vector<4x96xf32> to vector<1x96xf32>
    %cst_20 = arith.constant dense<0.000000e+00> : vector<1x96xf32>
    %27 = tpu.matmul %25, %10, %cst_20 {dimension_numbers = #tpu.dot_dimension_numbers<[1], [0], [0], [1], [0, 0, 1, 1], [], []>} : vector<1x8xf32>, vector<8x96xf32>, vector<1x96xf32> -> vector<1x96xf32>
    %28 = arith.addf %26, %27 : vector<1x96xf32>
    %29 = vector.extract_strided_slice %28 {offsets = [0, 0], sizes = [1, 32], strides = [1, 1]} : vector<1x96xf32> to vector<1x32xf32>
    %30 = vector.extract_strided_slice %15 {offsets = [0, 0], sizes = [1, 32], strides = [1, 1]} : vector<1x96xf32> to vector<1x32xf32>
    %31 = arith.addf %29, %30 : vector<1x32xf32>
    %32 = arith.negf %31 : vector<1x32xf32>
    %33 = math.exp %32 : vector<1x32xf32>
    %cst_21 = arith.constant 1.000000e+00 : f32
    %34 = vector.broadcast %cst_21 : f32 to vector<1x32xf32>
    %35 = arith.addf %34, %33 : vector<1x32xf32>
    %36 = arith.divf %34, %35 : vector<1x32xf32>
    %37 = vector.extract_strided_slice %28 {offsets = [0, 32], sizes = [1, 32], strides = [1, 1]} : vector<1x96xf32> to vector<1x32xf32>
    %38 = vector.extract_strided_slice %15 {offsets = [0, 32], sizes = [1, 32], strides = [1, 1]} : vector<1x96xf32> to vector<1x32xf32>
    %39 = arith.addf %37, %38 : vector<1x32xf32>
    %40 = arith.negf %39 : vector<1x32xf32>
    %41 = math.exp %40 : vector<1x32xf32>
    %cst_22 = arith.constant 1.000000e+00 : f32
    %42 = vector.broadcast %cst_22 : f32 to vector<1x32xf32>
    %43 = arith.addf %42, %41 : vector<1x32xf32>
    %44 = arith.divf %42, %43 : vector<1x32xf32>
    %45 = vector.extract_strided_slice %28 {offsets = [0, 64], sizes = [1, 32], strides = [1, 1]} : vector<1x96xf32> to vector<1x32xf32>
    %46 = vector.extract_strided_slice %15 {offsets = [0, 64], sizes = [1, 32], strides = [1, 1]} : vector<1x96xf32> to vector<1x32xf32>
    %47 = arith.mulf %36, %46 : vector<1x32xf32>
    %48 = arith.addf %45, %47 : vector<1x32xf32>
    %49 = math.tanh %48 : vector<1x32xf32>
    %cst_23 = arith.constant 1.000000e+00 : f32
    %50 = vector.broadcast %cst_23 : f32 to vector<1x32xf32>
    %51 = arith.subf %50, %44 : vector<1x32xf32>
    %52 = arith.mulf %51, %49 : vector<1x32xf32>
    %53 = arith.mulf %44, %11 : vector<1x32xf32>
    %54 = arith.addf %52, %53 : vector<1x32xf32>
    %cst_24 = arith.constant dense<0.000000e+00> : vector<1x128xf32>
    %55 = tpu.matmul %54, %1, %cst_24 {dimension_numbers = #tpu.dot_dimension_numbers<[1], [0], [0], [1], [0, 0, 1, 1], [], []>} : vector<1x32xf32>, vector<32x128xf32>, vector<1x128xf32> -> vector<1x128xf32>
    %56 = vector.extract_strided_slice %55 {offsets = [0, 0], sizes = [1, 32], strides = [1, 1]} : vector<1x128xf32> to vector<1x32xf32>
    %57 = vector.extract_strided_slice %55 {offsets = [0, 32], sizes = [1, 96], strides = [1, 1]} : vector<1x128xf32> to vector<1x96xf32>
    %58 = arith.addf %57, %2 : vector<1x96xf32>
    %cst_25 = arith.constant dense<0.000000e+00> : vector<1x8xf32>
    %59 = tpu.matmul %56, %0, %cst_25 {dimension_numbers = #tpu.dot_dimension_numbers<[1], [1], [0], [0], [0, 0, 1, 0], [], []>} : vector<1x32xf32>, vector<8x32xf32>, vector<1x8xf32> -> vector<1x8xf32>
    %cst_26 = arith.constant dense<0xFF800000> : vector<1xf32>
    %60 = vector.multi_reduction <maximumf>, %59, %cst_26 [1] : vector<1x8xf32> to vector<1xf32>
    %61 = vector.shape_cast %60 : vector<1xf32> to vector<1x1xf32>
    %62 = vector.broadcast %61 : vector<1x1xf32> to vector<1x8xf32>
    %63 = arith.subf %59, %62 : vector<1x8xf32>
    %64 = math.exp %63 : vector<1x8xf32>
    %cst_27 = arith.constant dense<0.000000e+00> : vector<1xf32>
    %65 = vector.multi_reduction <add>, %64, %cst_27 [1] : vector<1x8xf32> to vector<1xf32>
    %66 = vector.shape_cast %65 : vector<1xf32> to vector<1x1xf32>
    %67 = vector.broadcast %66 : vector<1x1xf32> to vector<1x8xf32>
    %68 = arith.divf %64, %67 : vector<1x8xf32>
    %69 = vector.extract_strided_slice %8 {offsets = [1, 0], sizes = [1, 96], strides = [1, 1]} : vector<4x96xf32> to vector<1x96xf32>
    %cst_28 = arith.constant dense<0.000000e+00> : vector<1x96xf32>
    %70 = tpu.matmul %68, %10, %cst_28 {dimension_numbers = #tpu.dot_dimension_numbers<[1], [0], [0], [1], [0, 0, 1, 1], [], []>} : vector<1x8xf32>, vector<8x96xf32>, vector<1x96xf32> -> vector<1x96xf32>
    %71 = arith.addf %69, %70 : vector<1x96xf32>
    %72 = vector.extract_strided_slice %71 {offsets = [0, 0], sizes = [1, 32], strides = [1, 1]} : vector<1x96xf32> to vector<1x32xf32>
    %73 = vector.extract_strided_slice %58 {offsets = [0, 0], sizes = [1, 32], strides = [1, 1]} : vector<1x96xf32> to vector<1x32xf32>
    %74 = arith.addf %72, %73 : vector<1x32xf32>
    %75 = arith.negf %74 : vector<1x32xf32>
    %76 = math.exp %75 : vector<1x32xf32>
    %cst_29 = arith.constant 1.000000e+00 : f32
    %77 = vector.broadcast %cst_29 : f32 to vector<1x32xf32>
    %78 = arith.addf %77, %76 : vector<1x32xf32>
    %79 = arith.divf %77, %78 : vector<1x32xf32>
    %80 = vector.extract_strided_slice %71 {offsets = [0, 32], sizes = [1, 32], strides = [1, 1]} : vector<1x96xf32> to vector<1x32xf32>
    %81 = vector.extract_strided_slice %58 {offsets = [0, 32], sizes = [1, 32], strides = [1, 1]} : vector<1x96xf32> to vector<1x32xf32>
    %82 = arith.addf %80, %81 : vector<1x32xf32>
    %83 = arith.negf %82 : vector<1x32xf32>
    %84 = math.exp %83 : vector<1x32xf32>
    %cst_30 = arith.constant 1.000000e+00 : f32
    %85 = vector.broadcast %cst_30 : f32 to vector<1x32xf32>
    %86 = arith.addf %85, %84 : vector<1x32xf32>
    %87 = arith.divf %85, %86 : vector<1x32xf32>
    %88 = vector.extract_strided_slice %71 {offsets = [0, 64], sizes = [1, 32], strides = [1, 1]} : vector<1x96xf32> to vector<1x32xf32>
    %89 = vector.extract_strided_slice %58 {offsets = [0, 64], sizes = [1, 32], strides = [1, 1]} : vector<1x96xf32> to vector<1x32xf32>
    %90 = arith.mulf %79, %89 : vector<1x32xf32>
    %91 = arith.addf %88, %90 : vector<1x32xf32>
    %92 = math.tanh %91 : vector<1x32xf32>
    %cst_31 = arith.constant 1.000000e+00 : f32
    %93 = vector.broadcast %cst_31 : f32 to vector<1x32xf32>
    %94 = arith.subf %93, %87 : vector<1x32xf32>
    %95 = arith.mulf %94, %92 : vector<1x32xf32>
    %96 = arith.mulf %87, %54 : vector<1x32xf32>
    %97 = arith.addf %95, %96 : vector<1x32xf32>
    %cst_32 = arith.constant dense<0.000000e+00> : vector<1x128xf32>
    %98 = tpu.matmul %97, %1, %cst_32 {dimension_numbers = #tpu.dot_dimension_numbers<[1], [0], [0], [1], [0, 0, 1, 1], [], []>} : vector<1x32xf32>, vector<32x128xf32>, vector<1x128xf32> -> vector<1x128xf32>
    %99 = vector.extract_strided_slice %98 {offsets = [0, 0], sizes = [1, 32], strides = [1, 1]} : vector<1x128xf32> to vector<1x32xf32>
    %100 = vector.extract_strided_slice %98 {offsets = [0, 32], sizes = [1, 96], strides = [1, 1]} : vector<1x128xf32> to vector<1x96xf32>
    %101 = arith.addf %100, %2 : vector<1x96xf32>
    %cst_33 = arith.constant dense<0.000000e+00> : vector<1x8xf32>
    %102 = tpu.matmul %99, %0, %cst_33 {dimension_numbers = #tpu.dot_dimension_numbers<[1], [1], [0], [0], [0, 0, 1, 0], [], []>} : vector<1x32xf32>, vector<8x32xf32>, vector<1x8xf32> -> vector<1x8xf32>
    %cst_34 = arith.constant dense<0xFF800000> : vector<1xf32>
    %103 = vector.multi_reduction <maximumf>, %102, %cst_34 [1] : vector<1x8xf32> to vector<1xf32>
    %104 = vector.shape_cast %103 : vector<1xf32> to vector<1x1xf32>
    %105 = vector.broadcast %104 : vector<1x1xf32> to vector<1x8xf32>
    %106 = arith.subf %102, %105 : vector<1x8xf32>
    %107 = math.exp %106 : vector<1x8xf32>
    %cst_35 = arith.constant dense<0.000000e+00> : vector<1xf32>
    %108 = vector.multi_reduction <add>, %107, %cst_35 [1] : vector<1x8xf32> to vector<1xf32>
    %109 = vector.shape_cast %108 : vector<1xf32> to vector<1x1xf32>
    %110 = vector.broadcast %109 : vector<1x1xf32> to vector<1x8xf32>
    %111 = arith.divf %107, %110 : vector<1x8xf32>
    %112 = vector.extract_strided_slice %8 {offsets = [2, 0], sizes = [1, 96], strides = [1, 1]} : vector<4x96xf32> to vector<1x96xf32>
    %cst_36 = arith.constant dense<0.000000e+00> : vector<1x96xf32>
    %113 = tpu.matmul %111, %10, %cst_36 {dimension_numbers = #tpu.dot_dimension_numbers<[1], [0], [0], [1], [0, 0, 1, 1], [], []>} : vector<1x8xf32>, vector<8x96xf32>, vector<1x96xf32> -> vector<1x96xf32>
    %114 = arith.addf %112, %113 : vector<1x96xf32>
    %115 = vector.extract_strided_slice %114 {offsets = [0, 0], sizes = [1, 32], strides = [1, 1]} : vector<1x96xf32> to vector<1x32xf32>
    %116 = vector.extract_strided_slice %101 {offsets = [0, 0], sizes = [1, 32], strides = [1, 1]} : vector<1x96xf32> to vector<1x32xf32>
    %117 = arith.addf %115, %116 : vector<1x32xf32>
    %118 = arith.negf %117 : vector<1x32xf32>
    %119 = math.exp %118 : vector<1x32xf32>
    %cst_37 = arith.constant 1.000000e+00 : f32
    %120 = vector.broadcast %cst_37 : f32 to vector<1x32xf32>
    %121 = arith.addf %120, %119 : vector<1x32xf32>
    %122 = arith.divf %120, %121 : vector<1x32xf32>
    %123 = vector.extract_strided_slice %114 {offsets = [0, 32], sizes = [1, 32], strides = [1, 1]} : vector<1x96xf32> to vector<1x32xf32>
    %124 = vector.extract_strided_slice %101 {offsets = [0, 32], sizes = [1, 32], strides = [1, 1]} : vector<1x96xf32> to vector<1x32xf32>
    %125 = arith.addf %123, %124 : vector<1x32xf32>
    %126 = arith.negf %125 : vector<1x32xf32>
    %127 = math.exp %126 : vector<1x32xf32>
    %cst_38 = arith.constant 1.000000e+00 : f32
    %128 = vector.broadcast %cst_38 : f32 to vector<1x32xf32>
    %129 = arith.addf %128, %127 : vector<1x32xf32>
    %130 = arith.divf %128, %129 : vector<1x32xf32>
    %131 = vector.extract_strided_slice %114 {offsets = [0, 64], sizes = [1, 32], strides = [1, 1]} : vector<1x96xf32> to vector<1x32xf32>
    %132 = vector.extract_strided_slice %101 {offsets = [0, 64], sizes = [1, 32], strides = [1, 1]} : vector<1x96xf32> to vector<1x32xf32>
    %133 = arith.mulf %122, %132 : vector<1x32xf32>
    %134 = arith.addf %131, %133 : vector<1x32xf32>
    %135 = math.tanh %134 : vector<1x32xf32>
    %cst_39 = arith.constant 1.000000e+00 : f32
    %136 = vector.broadcast %cst_39 : f32 to vector<1x32xf32>
    %137 = arith.subf %136, %130 : vector<1x32xf32>
    %138 = arith.mulf %137, %135 : vector<1x32xf32>
    %139 = arith.mulf %130, %97 : vector<1x32xf32>
    %140 = arith.addf %138, %139 : vector<1x32xf32>
    %cst_40 = arith.constant dense<0.000000e+00> : vector<1x128xf32>
    %141 = tpu.matmul %140, %1, %cst_40 {dimension_numbers = #tpu.dot_dimension_numbers<[1], [0], [0], [1], [0, 0, 1, 1], [], []>} : vector<1x32xf32>, vector<32x128xf32>, vector<1x128xf32> -> vector<1x128xf32>
    %142 = vector.extract_strided_slice %141 {offsets = [0, 0], sizes = [1, 32], strides = [1, 1]} : vector<1x128xf32> to vector<1x32xf32>
    %143 = vector.extract_strided_slice %141 {offsets = [0, 32], sizes = [1, 96], strides = [1, 1]} : vector<1x128xf32> to vector<1x96xf32>
    %144 = arith.addf %143, %2 : vector<1x96xf32>
    %cst_41 = arith.constant dense<0.000000e+00> : vector<1x8xf32>
    %145 = tpu.matmul %142, %0, %cst_41 {dimension_numbers = #tpu.dot_dimension_numbers<[1], [1], [0], [0], [0, 0, 1, 0], [], []>} : vector<1x32xf32>, vector<8x32xf32>, vector<1x8xf32> -> vector<1x8xf32>
    %cst_42 = arith.constant dense<0xFF800000> : vector<1xf32>
    %146 = vector.multi_reduction <maximumf>, %145, %cst_42 [1] : vector<1x8xf32> to vector<1xf32>
    %147 = vector.shape_cast %146 : vector<1xf32> to vector<1x1xf32>
    %148 = vector.broadcast %147 : vector<1x1xf32> to vector<1x8xf32>
    %149 = arith.subf %145, %148 : vector<1x8xf32>
    %150 = math.exp %149 : vector<1x8xf32>
    %cst_43 = arith.constant dense<0.000000e+00> : vector<1xf32>
    %151 = vector.multi_reduction <add>, %150, %cst_43 [1] : vector<1x8xf32> to vector<1xf32>
    %152 = vector.shape_cast %151 : vector<1xf32> to vector<1x1xf32>
    %153 = vector.broadcast %152 : vector<1x1xf32> to vector<1x8xf32>
    %154 = arith.divf %150, %153 : vector<1x8xf32>
    %155 = vector.extract_strided_slice %8 {offsets = [3, 0], sizes = [1, 96], strides = [1, 1]} : vector<4x96xf32> to vector<1x96xf32>
    %cst_44 = arith.constant dense<0.000000e+00> : vector<1x96xf32>
    %156 = tpu.matmul %154, %10, %cst_44 {dimension_numbers = #tpu.dot_dimension_numbers<[1], [0], [0], [1], [0, 0, 1, 1], [], []>} : vector<1x8xf32>, vector<8x96xf32>, vector<1x96xf32> -> vector<1x96xf32>
    %157 = arith.addf %155, %156 : vector<1x96xf32>
    %158 = vector.extract_strided_slice %157 {offsets = [0, 0], sizes = [1, 32], strides = [1, 1]} : vector<1x96xf32> to vector<1x32xf32>
    %159 = vector.extract_strided_slice %144 {offsets = [0, 0], sizes = [1, 32], strides = [1, 1]} : vector<1x96xf32> to vector<1x32xf32>
    %160 = arith.addf %158, %159 : vector<1x32xf32>
    %161 = arith.negf %160 : vector<1x32xf32>
    %162 = math.exp %161 : vector<1x32xf32>
    %cst_45 = arith.constant 1.000000e+00 : f32
    %163 = vector.broadcast %cst_45 : f32 to vector<1x32xf32>
    %164 = arith.addf %163, %162 : vector<1x32xf32>
    %165 = arith.divf %163, %164 : vector<1x32xf32>
    %166 = vector.extract_strided_slice %157 {offsets = [0, 32], sizes = [1, 32], strides = [1, 1]} : vector<1x96xf32> to vector<1x32xf32>
    %167 = vector.extract_strided_slice %144 {offsets = [0, 32], sizes = [1, 32], strides = [1, 1]} : vector<1x96xf32> to vector<1x32xf32>
    %168 = arith.addf %166, %167 : vector<1x32xf32>
    %169 = arith.negf %168 : vector<1x32xf32>
    %170 = math.exp %169 : vector<1x32xf32>
    %cst_46 = arith.constant 1.000000e+00 : f32
    %171 = vector.broadcast %cst_46 : f32 to vector<1x32xf32>
    %172 = arith.addf %171, %170 : vector<1x32xf32>
    %173 = arith.divf %171, %172 : vector<1x32xf32>
    %174 = vector.extract_strided_slice %157 {offsets = [0, 64], sizes = [1, 32], strides = [1, 1]} : vector<1x96xf32> to vector<1x32xf32>
    %175 = vector.extract_strided_slice %144 {offsets = [0, 64], sizes = [1, 32], strides = [1, 1]} : vector<1x96xf32> to vector<1x32xf32>
    %176 = arith.mulf %165, %175 : vector<1x32xf32>
    %177 = arith.addf %174, %176 : vector<1x32xf32>
    %178 = math.tanh %177 : vector<1x32xf32>
    %cst_47 = arith.constant 1.000000e+00 : f32
    %179 = vector.broadcast %cst_47 : f32 to vector<1x32xf32>
    %180 = arith.subf %179, %173 : vector<1x32xf32>
    %181 = arith.mulf %180, %178 : vector<1x32xf32>
    %182 = arith.mulf %173, %140 : vector<1x32xf32>
    %183 = arith.addf %181, %182 : vector<1x32xf32>
    %184 = tpu.concatenate %25, %68, %111, %154 in 0 : vector<1x8xf32>, vector<1x8xf32>, vector<1x8xf32>, vector<1x8xf32> -> vector<4x8xf32>
    %c0_48 = arith.constant 0 : index
    %c0_49 = arith.constant 0 : index
    %185 = vector.load %arg12[%c0_48, %c0_49] : memref<4x8xf32, #tpu.memory_space<vmem>>, vector<4x8xf32>
    tpu.vector_store %arg12[%c0_48, %c0_49], %184 {strides = array<i32>} : memref<4x8xf32, #tpu.memory_space<vmem>>, vector<4x8xf32>,
    %c0_50 = arith.constant 0 : index
    %c0_51 = arith.constant 0 : index
    %186 = vector.load %arg11[%c0_50, %c0_51] : memref<1x32xf32, #tpu.memory_space<vmem>>, vector<1x32xf32>
    tpu.vector_store %arg11[%c0_50, %c0_51], %183 {strides = array<i32>} : memref<1x32xf32, #tpu.memory_space<vmem>>, vector<1x32xf32>,
    %187 = tpu.concatenate %54, %97, %140, %183 in 0 : vector<1x32xf32>, vector<1x32xf32>, vector<1x32xf32>, vector<1x32xf32> -> vector<4x32xf32>
    %c0_52 = arith.constant 0 : index
    %c0_53 = arith.constant 0 : index
    %188 = vector.load %arg8[%c0_52, %c0_53] : memref<32x128xf32, #tpu.memory_space<vmem>>, vector<32x128xf32>
    %cst_54 = arith.constant dense<0.000000e+00> : vector<4x128xf32>
    %189 = tpu.matmul %187, %188, %cst_54 {dimension_numbers = #tpu.dot_dimension_numbers<[1], [0], [0], [1], [0, 0, 1, 1], [], []>} : vector<4x32xf32>, vector<32x128xf32>, vector<4x128xf32> -> vector<4x128xf32>
    %c0_55 = arith.constant 0 : index
    %c0_56 = arith.constant 0 : index
    %190 = vector.load %arg9[%c0_55, %c0_56] : memref<1x128xf32, #tpu.memory_space<vmem>>, vector<1x128xf32>
    %191 = vector.broadcast %190 : vector<1x128xf32> to vector<4x128xf32>
    %192 = arith.addf %189, %191 : vector<4x128xf32>
    %cst_57 = arith.constant dense<0xFF800000> : vector<4xf32>
    %193 = vector.multi_reduction <maximumf>, %192, %cst_57 [1] : vector<4x128xf32> to vector<4xf32>
    %194 = vector.shape_cast %193 : vector<4xf32> to vector<4x1xf32>
    %195 = vector.broadcast %194 : vector<4x1xf32> to vector<4x128xf32>
    %196 = arith.subf %192, %195 : vector<4x128xf32>
    %197 = math.exp %196 : vector<4x128xf32>
    %cst_58 = arith.constant dense<0.000000e+00> : vector<4xf32>
    %198 = vector.multi_reduction <add>, %197, %cst_58 [1] : vector<4x128xf32> to vector<4xf32>
    %199 = vector.shape_cast %198 : vector<4xf32> to vector<4x1xf32>
    %200 = math.log %199 : vector<4x1xf32>
    %201 = vector.broadcast %200 : vector<4x1xf32> to vector<4x128xf32>
    %202 = arith.subf %196, %201 : vector<4x128xf32>
    %c0_59 = arith.constant 0 : index
    %c0_60 = arith.constant 0 : index
    %203 = vector.load %arg10[%c0_59, %c0_60] : memref<4x128xf32, #tpu.memory_space<vmem>>, vector<4x128xf32>
    tpu.vector_store %arg10[%c0_59, %c0_60], %202 {strides = array<i32>} : memref<4x128xf32, #tpu.memory_space<vmem>>, vector<4x128xf32>,
    return
  }
}

</mosaic_0001>

<llo_original>
// kernel: bahdanau_attn_decoder_decode.1
$region0: #{bahdanau_attn_decoder_decode.1}
  #allocation0 [shape = 'u32[]', space=smem, size = 0x4, offset = 0x4, fixed_abs, tag = 'smem constant byte address 0x4 - core index']
  #allocation1 [shape = 'u32[144,128]{1,0:T(1,128)}', space=vmem, size = 0x12000, scoped, tag = 'internal scratch']
  %s0 = inlined_call_operand.vmem [shape: f32[4,32], index: 0, kind: input, shape index: {}]
  %s1 = inlined_call_operand.vmem [shape: f32[1,32], index: 1, kind: input, shape index: {}]
  %s2 = inlined_call_operand.vmem [shape: f32[8,32], index: 2, kind: input, shape index: {}]
  %s3 = inlined_call_operand.vmem [shape: f32[32,128], index: 3, kind: input, shape index: {}]
  %s4 = inlined_call_operand.vmem [shape: f32[32,96], index: 4, kind: input, shape index: {}]
  %s5 = inlined_call_operand.vmem [shape: f32[32,96], index: 5, kind: input, shape index: {}]
  %s6 = inlined_call_operand.vmem [shape: f32[1,96], index: 6, kind: input, shape index: {}]
  %s7 = inlined_call_operand.vmem [shape: f32[1,96], index: 7, kind: input, shape index: {}]
  %s8 = inlined_call_operand.vmem [shape: f32[32,128], index: 8, kind: input, shape index: {}]
  %s9 = inlined_call_operand.vmem [shape: f32[1,128], index: 9, kind: input, shape index: {}]
  %s10 = inlined_call_operand.hbm [shape: f32[4,128], index: 10, kind: output, shape index: {0}]
  %s11 = inlined_call_operand.hbm [shape: f32[1,32], index: 11, kind: output, shape index: {1}]
  %s12 = inlined_call_operand.hbm [shape: f32[4,8], index: 12, kind: output, shape index: {2}]
  %13 = xla_tuple %s10, %s11, %s12
  %s14 = sld [smem:[#allocation0]]
  $region66: #{bahdanau_attn_decoder_decode.1} parent=0
    _
  %s16 = ssub.s32 1, %s14
  %s17 = scalar_select 0, %s16, %s14
  $region1: #{bahdanau_attn_decoder_decode.1} parent=0
    #allocation2 [shape = 'u8[2048]{0}', space=vmem, size = 0x800, scoped, tag = 'output window, operand 0, single buffered']
    #allocation3 [shape = 's32[1]{0}', space=sflag, size = 0x4, scoped, tag = 'scoped memory for bahdanau_attn_decoder_decode.1']
    #allocation4 [shape = 'u8[512]{0}', space=vmem, size = 0x400, scoped, tag = 'output window, operand 1, single buffered']
    #allocation5 [shape = 's32[1]{0}', space=sflag, size = 0x4, scoped, tag = 'scoped memory for bahdanau_attn_decoder_decode.1']
    #allocation6 [shape = 'u8[2048]{0}', space=vmem, size = 0x800, scoped, tag = 'output window, operand 2, single buffered']
    %18 = vsyncpa [#allocation3], 0
    %19 = vsyncpa [#allocation5], 0
    // Predicated region
    $region2: #{bahdanau_attn_decoder_decode.1} parent=1 // pred_check
      _
    $region3: #{bahdanau_attn_decoder_decode.1} parent=1 // pred_check_branch
      %21 = sbr.rel (0) target = $region5
    $region4: #{bahdanau_attn_decoder_decode.1} parent=1 // pred_region
      _
    $region5: #{bahdanau_attn_decoder_decode.1} parent=1 // pred_fallthru
      _
    // Predicated region
    $region6: #{bahdanau_attn_decoder_decode.1} parent=1 // pred_check
      _
    $region7: #{bahdanau_attn_decoder_decode.1} parent=1 // pred_check_branch
      %23 = sbr.rel (0) target = $region9
    $region8: #{bahdanau_attn_decoder_decode.1} parent=1 // pred_region
      _
    $region9: #{bahdanau_attn_decoder_decode.1} parent=1 // pred_fallthru
      _
    // Predicated region
    $region10: #{bahdanau_attn_decoder_decode.1} parent=1 // pred_check
      _
    $region11: #{bahdanau_attn_decoder_decode.1} parent=1 // pred_check_branch
      %25 = sbr.rel (0) target = $region13
    $region12: #{bahdanau_attn_decoder_decode.1} parent=1 // pred_region
      _
    $region13: #{bahdanau_attn_decoder_decode.1} parent=1 // pred_fallthru
      _
    // Predicated region
    $region14: #{bahdanau_attn_decoder_decode.1} parent=1 // pred_check
      _
    $region15: #{bahdanau_attn_decoder_decode.1} parent=1 // pred_check_branch
      %27 = sbr.rel (0) target = $region17
    $region16: #{bahdanau_attn_decoder_decode.1} parent=1 // pred_region
      _
    $region17: #{bahdanau_attn_decoder_decode.1} parent=1 // pred_fallthru
      _
    // Predicated region
    $region18: #{bahdanau_attn_decoder_decode.1} parent=1 // pred_check
      _
    $region19: #{bahdanau_attn_decoder_decode.1} parent=1 // pred_check_branch
      %29 = sbr.rel (0) target = $region21
    $region20: #{bahdanau_attn_decoder_decode.1} parent=1 // pred_region
      _
    $region21: #{bahdanau_attn_decoder_decode.1} parent=1 // pred_fallthru
      _
    // Predicated region
    $region22: #{bahdanau_attn_decoder_decode.1} parent=1 // pred_check
      _
    $region23: #{bahdanau_attn_decoder_decode.1} parent=1 // pred_check_branch
      %31 = sbr.rel (0) target = $region25
    $region24: #{bahdanau_attn_decoder_decode.1} parent=1 // pred_region
      _
    $region25: #{bahdanau_attn_decoder_decode.1} parent=1 // pred_fallthru
      _
    // Predicated region
    $region26: #{bahdanau_attn_decoder_decode.1} parent=1 // pred_check
      _
    $region27: #{bahdanau_attn_decoder_decode.1} parent=1 // pred_check_branch
      %33 = sbr.rel (0) target = $region29
    $region28: #{bahdanau_attn_decoder_decode.1} parent=1 // pred_region
      _
    $region29: #{bahdanau_attn_decoder_decode.1} parent=1 // pred_fallthru
      _
    // Predicated region
    $region30: #{bahdanau_attn_decoder_decode.1} parent=1 // pred_check
      _
    $region31: #{bahdanau_attn_decoder_decode.1} parent=1 // pred_check_branch
      %35 = sbr.rel (0) target = $region33
    $region32: #{bahdanau_attn_decoder_decode.1} parent=1 // pred_region
      _
    $region33: #{bahdanau_attn_decoder_decode.1} parent=1 // pred_fallthru
      _
    // Predicated region
    $region34: #{bahdanau_attn_decoder_decode.1} parent=1 // pred_check
      _
    $region35: #{bahdanau_attn_decoder_decode.1} parent=1 // pred_check_branch
      %37 = sbr.rel (0) target = $region37
    $region36: #{bahdanau_attn_decoder_decode.1} parent=1 // pred_region
      _
    $region37: #{bahdanau_attn_decoder_decode.1} parent=1 // pred_fallthru
      _
    // Predicated region
    $region38: #{bahdanau_attn_decoder_decode.1} parent=1 // pred_check
      _
    $region39: #{bahdanau_attn_decoder_decode.1} parent=1 // pred_check_branch
      %39 = sbr.rel (0) target = $region41
    $region40: #{bahdanau_attn_decoder_decode.1} parent=1 // pred_region
      _
    $region41: #{bahdanau_attn_decoder_decode.1} parent=1 // pred_fallthru
      _
    %v40 = vld [vmem:[%s2] sm:$0xff]
    %v41 = vld [vmem:[%s3] sm:$0xff]
    %v42 = vld [vmem:[%s3 + $0x8] sm:$0xff]
    %v43 = vld [vmem:[%s3 + $0x10] sm:$0xff]
    %v44 = vld [vmem:[%s3 + $0x18] sm:$0xff]
    %v45 = vld [vmem:[%s7] sm:$0x1]
    %v46 = vld [vmem:[%s0] sm:$0xf]
    %v47 = vld [vmem:[%s4] sm:$0xff]
    %v48 = vld [vmem:[%s4 + $0x8] sm:$0xff]
    %v49 = vld [vmem:[%s4 + $0x10] sm:$0xff]
    %v50 = vld [vmem:[%s4 + $0x18] sm:$0xff]
    %v51 = vld [vmem:[%s6] sm:$0x1]
    %v53 = vlaneseq
    %v54 = vshrl.u32 %v53, 7
    %v55 = vsub.s32 0, %v54
    %v56 = vrot.slane %v51, %v55
    %vm58 = vcmask 261120
    %v60 = vsel %vm58, %v46, 0
    %62 = vmatprep.subr.mxu0 0.0
    %63 = vmatpush1.msra.mxu0 %v47
    %64 = vmatprep.subr.mxu0 0.0
    %65 = vmatpush1.msra.mxu0 %v48
    %66 = vmatprep.subr.mxu0 0.0
    %67 = vmatpush1.msra.mxu0 %v49
    %68 = vmatprep.subr.mxu0 0.0
    %69 = vmatpush1.msra.mxu0 %v50
    %70 = vmatprep.subr.mxu0 0.0
    %71 = vmatpush1.msra.mxu0 0.0
    %72 = vmatprep.subr.mxu0 0.0
    %73 = vmatpush1.msra.mxu0 0.0
    %74 = vmatprep.subr.mxu0 0.0
    %75 = vmatpush1.msra.mxu0 0.0
    %76 = vmatprep.subr.mxu0 0.0
    %77 = vmatpush1.msra.mxu0 0.0
    %78 = vmatprep.subr.mxu0 0.0
    %79 = vmatpush1.msra.mxu0 0.0
    %80 = vmatprep.subr.mxu0 0.0
    %81 = vmatpush1.msra.mxu0 0.0
    %82 = vmatprep.subr.mxu0 0.0
    %83 = vmatpush1.msra.mxu0 0.0
    %84 = vmatprep.subr.mxu0 0.0
    %85 = vmatpush1.msra.mxu0 0.0
    %86 = vmatprep.subr.mxu0 0.0
    %87 = vmatpush1.msra.mxu0 0.0
    %88 = vmatprep.subr.mxu0 0.0
    %89 = vmatpush1.msra.mxu0 0.0
    %90 = vmatprep.subr.mxu0 0.0
    %91 = vmatpush1.msra.mxu0 0.0
    %92 = vmatprep.subr.mxu0 0.0
    %93 = vmatpush1.msra.mxu0 0.0
    %94 = vmatprep.subr.mxu0 0.0
    %95 = vmatpush1.msra.mxu0 0.0
    %96 = vmatprep.subr.mxu0 0.0
    %97 = vmatpush1.msra.mxu0 0.0
    %98 = vmatprep.subr.mxu0 0.0
    %99 = vmatpush1.msra.mxu0 0.0
    %100 = vmatprep.subr.mxu0 0.0
    %101 = vmatpush1.msra.mxu0 0.0
    %102 = vmatprep.subr.mxu0 0.0
    %103 = vmatpush1.msra.mxu0 0.0
    %104 = vmatprep.subr.mxu0 0.0
    %105 = vmatpush1.msra.mxu0 0.0
    %106 = vmatprep.subr.mxu0 0.0
    %107 = vmatpush1.msra.mxu0 0.0
    %108 = vmatprep.subr.mxu0 0.0
    %109 = vmatpush1.msra.mxu0 0.0
    %110 = vmatprep.subr.mxu0 0.0
    %111 = vmatpush1.msra.mxu0 0.0
    %112 = vmatprep.subr.mxu0 0.0
    %113 = vmatpush1.msra.mxu0 0.0
    %114 = vmatprep.subr.mxu0 0.0
    %115 = vmatpush1.msra.mxu0 0.0
    %116 = vmatprep.subr.mxu0 0.0
    %117 = vmatpush1.msra.mxu0 0.0
    %118 = vmatprep.subr.mxu0 0.0
    %119 = vmatpush1.msra.mxu0 0.0
    %120 = vmatprep.subr.mxu0 0.0
    %121 = vmatpush1.msra.mxu0 0.0
    %122 = vmatprep.subr.mxu0 0.0
    %123 = vmatpush1.msra.mxu0 0.0
    %124 = vmatprep.subr.mxu0 0.0
    %125 = vmatpush1.msra.mxu0 0.0
    %126 = vmatprep.mubr.f32.mxu0 0.0
    %127 = vmatmul.mubr.f32.gmra.mrb[0].mxu0 %v60
    %v128 = vpop.f32.mrb[0].mxu0
    %v129 = vadd.f32 %v56, %v128
    %v130 = vpop.f32.mrb[0].mxu0
    %131 = vdwg.mxu0
    %v132 = vld [vmem:[%s5] sm:$0xff]
    %v133 = vld [vmem:[%s5 + $0x8] sm:$0xff]
    %v134 = vld [vmem:[%s5 + $0x10] sm:$0xff]
    %v135 = vld [vmem:[%s5 + $0x18] sm:$0xff]
    %v137 = vsel %vm58, %v40, 0
    %139 = vmatprep.subr.mxu0 0.0
    %140 = vmatpush1.msra.mxu0 %v132
    %141 = vmatprep.subr.mxu0 0.0
    %142 = vmatpush1.msra.mxu0 %v133
    %143 = vmatprep.subr.mxu0 0.0
    %144 = vmatpush1.msra.mxu0 %v134
    %145 = vmatprep.subr.mxu0 0.0
    %146 = vmatpush1.msra.mxu0 %v135
    %147 = vmatprep.subr.mxu0 0.0
    %148 = vmatpush1.msra.mxu0 0.0
    %149 = vmatprep.subr.mxu0 0.0
    %150 = vmatpush1.msra.mxu0 0.0
    %151 = vmatprep.subr.mxu0 0.0
    %152 = vmatpush1.msra.mxu0 0.0
    %153 = vmatprep.subr.mxu0 0.0
    %154 = vmatpush1.msra.mxu0 0.0
    %155 = vmatprep.subr.mxu0 0.0
    %156 = vmatpush1.msra.mxu0 0.0
    %157 = vmatprep.subr.mxu0 0.0
    %158 = vmatpush1.msra.mxu0 0.0
    %159 = vmatprep.subr.mxu0 0.0
    %160 = vmatpush1.msra.mxu0 0.0
    %161 = vmatprep.subr.mxu0 0.0
    %162 = vmatpush1.msra.mxu0 0.0
    %163 = vmatprep.subr.mxu0 0.0
    %164 = vmatpush1.msra.mxu0 0.0
    %165 = vmatprep.subr.mxu0 0.0
    %166 = vmatpush1.msra.mxu0 0.0
    %167 = vmatprep.subr.mxu0 0.0
    %168 = vmatpush1.msra.mxu0 0.0
    %169 = vmatprep.subr.mxu0 0.0
    %170 = vmatpush1.msra.mxu0 0.0
    %171 = vmatprep.subr.mxu0 0.0
    %172 = vmatpush1.msra.mxu0 0.0
    %173 = vmatprep.subr.mxu0 0.0
    %174 = vmatpush1.msra.mxu0 0.0
    %175 = vmatprep.subr.mxu0 0.0
    %176 = vmatpush1.msra.mxu0 0.0
    %177 = vmatprep.subr.mxu0 0.0
    %178 = vmatpush1.msra.mxu0 0.0
    %179 = vmatprep.subr.mxu0 0.0
    %180 = vmatpush1.msra.mxu0 0.0
    %181 = vmatprep.subr.mxu0 0.0
    %182 = vmatpush1.msra.mxu0 0.0
    %183 = vmatprep.subr.mxu0 0.0
    %184 = vmatpush1.msra.mxu0 0.0
    %185 = vmatprep.subr.mxu0 0.0
    %186 = vmatpush1.msra.mxu0 0.0
    %187 = vmatprep.subr.mxu0 0.0
    %188 = vmatpush1.msra.mxu0 0.0
    %189 = vmatprep.subr.mxu0 0.0
    %190 = vmatpush1.msra.mxu0 0.0
    %191 = vmatprep.subr.mxu0 0.0
    %192 = vmatpush1.msra.mxu0 0.0
    %193 = vmatprep.subr.mxu0 0.0
    %194 = vmatpush1.msra.mxu0 0.0
    %195 = vmatprep.subr.mxu0 0.0
    %196 = vmatpush1.msra.mxu0 0.0
    %197 = vmatprep.subr.mxu0 0.0
    %198 = vmatpush1.msra.mxu0 0.0
    %199 = vmatprep.subr.mxu0 0.0
    %200 = vmatpush1.msra.mxu0 0.0
    %201 = vmatprep.subr.mxu0 0.0
    %202 = vmatpush1.msra.mxu0 0.0
    %203 = vmatprep.mubr.f32.mxu0 0.0
    %204 = vmatmul.mubr.f32.gmra.mrb[0].mxu0 %v137
    %v205 = vpop.f32.mrb[0].mxu0
    %v206 = vadd.f32 0.0, %v205
    %v207 = vpop.f32.mrb[0].mxu0
    %208 = vdwg.mxu0
    %v209 = vld [vmem:[%s1] sm:$0x1]
    %v211 = vsel %vm58, %v209, 0
    %213 = vmatprep.subr.mxu0 0.0
    %214 = vmatpush1.msra.mxu0 %v41
    %215 = vmatprep.subr.mxu0 0.0
    %216 = vmatpush1.msra.mxu0 %v42
    %217 = vmatprep.subr.mxu0 0.0
    %218 = vmatpush1.msra.mxu0 %v43
    %219 = vmatprep.subr.mxu0 0.0
    %220 = vmatpush1.msra.mxu0 %v44
    %221 = vmatprep.subr.mxu0 0.0
    %222 = vmatpush1.msra.mxu0 0.0
    %223 = vmatprep.subr.mxu0 0.0
    %224 = vmatpush1.msra.mxu0 0.0
    %225 = vmatprep.subr.mxu0 0.0
    %226 = vmatpush1.msra.mxu0 0.0
    %227 = vmatprep.subr.mxu0 0.0
    %228 = vmatpush1.msra.mxu0 0.0
    %229 = vmatprep.subr.mxu0 0.0
    %230 = vmatpush1.msra.mxu0 0.0
    %231 = vmatprep.subr.mxu0 0.0
    %232 = vmatpush1.msra.mxu0 0.0
    %233 = vmatprep.subr.mxu0 0.0
    %234 = vmatpush1.msra.mxu0 0.0
    %235 = vmatprep.subr.mxu0 0.0
    %236 = vmatpush1.msra.mxu0 0.0
    %237 = vmatprep.subr.mxu0 0.0
    %238 = vmatpush1.msra.mxu0 0.0
    %239 = vmatprep.subr.mxu0 0.0
    %240 = vmatpush1.msra.mxu0 0.0
    %241 = vmatprep.subr.mxu0 0.0
    %242 = vmatpush1.msra.mxu0 0.0
    %243 = vmatprep.subr.mxu0 0.0
    %244 = vmatpush1.msra.mxu0 0.0
    %245 = vmatprep.subr.mxu0 0.0
    %246 = vmatpush1.msra.mxu0 0.0
    %247 = vmatprep.subr.mxu0 0.0
    %248 = vmatpush1.msra.mxu0 0.0
    %249 = vmatprep.subr.mxu0 0.0
    %250 = vmatpush1.msra.mxu0 0.0
    %251 = vmatprep.subr.mxu0 0.0
    %252 = vmatpush1.msra.mxu0 0.0
    %253 = vmatprep.subr.mxu0 0.0
    %254 = vmatpush1.msra.mxu0 0.0
    %255 = vmatprep.subr.mxu0 0.0
    %256 = vmatpush1.msra.mxu0 0.0
    %257 = vmatprep.subr.mxu0 0.0
    %258 = vmatpush1.msra.mxu0 0.0
    %259 = vmatprep.subr.mxu0 0.0
    %260 = vmatpush1.msra.mxu0 0.0
    %261 = vmatprep.subr.mxu0 0.0
    %262 = vmatpush1.msra.mxu0 0.0
    %263 = vmatprep.subr.mxu0 0.0
    %264 = vmatpush1.msra.mxu0 0.0
    %265 = vmatprep.subr.mxu0 0.0
    %266 = vmatpush1.msra.mxu0 0.0
    %267 = vmatprep.subr.mxu0 0.0
    %268 = vmatpush1.msra.mxu0 0.0
    %269 = vmatprep.subr.mxu0 0.0
    %270 = vmatpush1.msra.mxu0 0.0
    %271 = vmatprep.subr.mxu0 0.0
    %272 = vmatpush1.msra.mxu0 0.0
    %273 = vmatprep.subr.mxu0 0.0
    %274 = vmatpush1.msra.mxu0 0.0
    %275 = vmatprep.subr.mxu0 0.0
    %276 = vmatpush1.msra.mxu0 0.0
    %277 = vmatprep.mubr.f32.mxu0 0.0
    %278 = vmatmul.mubr.f32.gmra.mrb[0].mxu0 %v211
    %v279 = vpop.f32.mrb[0].mxu0
    %v280 = vadd.f32 0.0, %v279
    %v281 = vpop.f32.mrb[0].mxu0
    %282 = vdwg.mxu0
    %v284 = vlaneseq
    %v285 = vshrl.u32 %v284, 7
    %v286 = vsub.s32 0, %v285
    %v287 = vrot.slane %v45, %v286
    %288 = vrot.lane.b32.xlu0 %v287, 32
    %v289 = vpop.permute.xlu0 %288
    %v291 = vadd.f32 %v280, %v289
    %v293 = vsel %vm58, %v280, 0
    %295 = vmatprep.subr.mxu0 0.0
    %296 = vmatpush1.xpose.msra.mxu0 %v137
    %297 = vmatprep.subr.mxu0 0.0
    %298 = vmatpush1.xpose.msra.mxu0 0.0
    %299 = vmatprep.subr.mxu0 0.0
    %300 = vmatpush1.xpose.msra.mxu0 0.0
    %301 = vmatprep.subr.mxu0 0.0
    %302 = vmatpush1.xpose.msra.mxu0 0.0
    %303 = vmatprep.subr.mxu0 0.0
    %304 = vmatpush1.xpose.msra.mxu0 0.0
    %305 = vmatprep.subr.mxu0 0.0
    %306 = vmatpush1.xpose.msra.mxu0 0.0
    %307 = vmatprep.subr.mxu0 0.0
    %308 = vmatpush1.xpose.msra.mxu0 0.0
    %309 = vmatprep.subr.mxu0 0.0
    %310 = vmatpush1.xpose.msra.mxu0 0.0
    %311 = vmatprep.subr.mxu0 0.0
    %312 = vmatpush1.xpose.msra.mxu0 0.0
    %313 = vmatprep.subr.mxu0 0.0
    %314 = vmatpush1.xpose.msra.mxu0 0.0
    %315 = vmatprep.subr.mxu0 0.0
    %316 = vmatpush1.xpose.msra.mxu0 0.0
    %317 = vmatprep.subr.mxu0 0.0
    %318 = vmatpush1.xpose.msra.mxu0 0.0
    %319 = vmatprep.subr.mxu0 0.0
    %320 = vmatpush1.xpose.msra.mxu0 0.0
    %321 = vmatprep.subr.mxu0 0.0
    %322 = vmatpush1.xpose.msra.mxu0 0.0
    %323 = vmatprep.subr.mxu0 0.0
    %324 = vmatpush1.xpose.msra.mxu0 0.0
    %325 = vmatprep.subr.mxu0 0.0
    %326 = vmatpush1.xpose.msra.mxu0 0.0
    %327 = vmatprep.subr.mxu0 0.0
    %328 = vmatpush1.xpose.msra.mxu0 0.0
    %329 = vmatprep.subr.mxu0 0.0
    %330 = vmatpush1.xpose.msra.mxu0 0.0
    %331 = vmatprep.subr.mxu0 0.0
    %332 = vmatpush1.xpose.msra.mxu0 0.0
    %333 = vmatprep.subr.mxu0 0.0
    %334 = vmatpush1.xpose.msra.mxu0 0.0
    %335 = vmatprep.subr.mxu0 0.0
    %336 = vmatpush1.xpose.msra.mxu0 0.0
    %337 = vmatprep.subr.mxu0 0.0
    %338 = vmatpush1.xpose.msra.mxu0 0.0
    %339 = vmatprep.subr.mxu0 0.0
    %340 = vmatpush1.xpose.msra.mxu0 0.0
    %341 = vmatprep.subr.mxu0 0.0
    %342 = vmatpush1.xpose.msra.mxu0 0.0
    %343 = vmatprep.subr.mxu0 0.0
    %344 = vmatpush1.xpose.msra.mxu0 0.0
    %345 = vmatprep.subr.mxu0 0.0
    %346 = vmatpush1.xpose.msra.mxu0 0.0
    %347 = vmatprep.subr.mxu0 0.0
    %348 = vmatpush1.xpose.msra.mxu0 0.0
    %349 = vmatprep.subr.mxu0 0.0
    %350 = vmatpush1.xpose.msra.mxu0 0.0
    %351 = vmatprep.subr.mxu0 0.0
    %352 = vmatpush1.xpose.msra.mxu0 0.0
    %353 = vmatprep.subr.mxu0 0.0
    %354 = vmatpush1.xpose.msra.mxu0 0.0
    %355 = vmatprep.subr.mxu0 0.0
    %356 = vmatpush1.xpose.msra.mxu0 0.0
    %357 = vmatprep.subr.mxu0 0.0
    %358 = vmatpush1.xpose.msra.mxu0 0.0
    %359 = vmatprep.mubr.f32.mxu0 0.0
    %360 = vmatmul.mubr.f32.gmra.mrb[0].mxu0 %v293
    %v361 = vpop.f32.mrb[0].mxu0
    %v362 = vadd.f32 0.0, %v361
    %v363 = vpop.f32.mrb[0].mxu0
    %364 = vdwg.mxu0
    %vm365 = vcmask 57344
    %v366 = vsel %vm365, %v362, -inf
    %367 = vmax.xlane.f32.xlu0 %v366
    %v368 = vpop.xlane.xlu0 %367
    %v369 = vsub.f32 %v362, %v368
    %v370 = vmul.f32 %v369, 1.442695
    %v371 = vpow.pop %v370
    %v372 = vsel %vm365, %v371, 0.0
    %373 = vadd.xlane.f32.xlu0 %v372
    %v374 = vpop.xlane.xlu0 %373
    %v375 = vrcp.pop %v374
    %v376 = vmul.f32 %v371, %v375
    %vm377 = vcmask 64512
    %v379 = vsel %vm377, %v376, 0
    %381 = vmatprep.subr.mxu0 0.0
    %382 = vmatpush1.msra.mxu0 %v206
    %383 = vmatprep.subr.mxu0 0.0
    %384 = vmatpush1.msra.mxu0 0.0
    %385 = vmatprep.subr.mxu0 0.0
    %386 = vmatpush1.msra.mxu0 0.0
    %387 = vmatprep.subr.mxu0 0.0
    %388 = vmatpush1.msra.mxu0 0.0
    %389 = vmatprep.subr.mxu0 0.0
    %390 = vmatpush1.msra.mxu0 0.0
    %391 = vmatprep.subr.mxu0 0.0
    %392 = vmatpush1.msra.mxu0 0.0
    %393 = vmatprep.subr.mxu0 0.0
    %394 = vmatpush1.msra.mxu0 0.0
    %395 = vmatprep.subr.mxu0 0.0
    %396 = vmatpush1.msra.mxu0 0.0
    %397 = vmatprep.subr.mxu0 0.0
    %398 = vmatpush1.msra.mxu0 0.0
    %399 = vmatprep.subr.mxu0 0.0
    %400 = vmatpush1.msra.mxu0 0.0
    %401 = vmatprep.subr.mxu0 0.0
    %402 = vmatpush1.msra.mxu0 0.0
    %403 = vmatprep.subr.mxu0 0.0
    %404 = vmatpush1.msra.mxu0 0.0
    %405 = vmatprep.subr.mxu0 0.0
    %406 = vmatpush1.msra.mxu0 0.0
    %407 = vmatprep.subr.mxu0 0.0
    %408 = vmatpush1.msra.mxu0 0.0
    %409 = vmatprep.subr.mxu0 0.0
    %410 = vmatpush1.msra.mxu0 0.0
    %411 = vmatprep.subr.mxu0 0.0
    %412 = vmatpush1.msra.mxu0 0.0
    %413 = vmatprep.subr.mxu0 0.0
    %414 = vmatpush1.msra.mxu0 0.0
    %415 = vmatprep.subr.mxu0 0.0
    %416 = vmatpush1.msra.mxu0 0.0
    %417 = vmatprep.subr.mxu0 0.0
    %418 = vmatpush1.msra.mxu0 0.0
    %419 = vmatprep.subr.mxu0 0.0
    %420 = vmatpush1.msra.mxu0 0.0
    %421 = vmatprep.subr.mxu0 0.0
    %422 = vmatpush1.msra.mxu0 0.0
    %423 = vmatprep.subr.mxu0 0.0
    %424 = vmatpush1.msra.mxu0 0.0
    %425 = vmatprep.subr.mxu0 0.0
    %426 = vmatpush1.msra.mxu0 0.0
    %427 = vmatprep.subr.mxu0 0.0
    %428 = vmatpush1.msra.mxu0 0.0
    %429 = vmatprep.subr.mxu0 0.0
    %430 = vmatpush1.msra.mxu0 0.0
    %431 = vmatprep.subr.mxu0 0.0
    %432 = vmatpush1.msra.mxu0 0.0
    %433 = vmatprep.subr.mxu0 0.0
    %434 = vmatpush1.msra.mxu0 0.0
    %435 = vmatprep.subr.mxu0 0.0
    %436 = vmatpush1.msra.mxu0 0.0
    %437 = vmatprep.subr.mxu0 0.0
    %438 = vmatpush1.msra.mxu0 0.0
    %439 = vmatprep.subr.mxu0 0.0
    %440 = vmatpush1.msra.mxu0 0.0
    %441 = vmatprep.subr.mxu0 0.0
    %442 = vmatpush1.msra.mxu0 0.0
    %443 = vmatprep.subr.mxu0 0.0
    %444 = vmatpush1.msra.mxu0 0.0
    %445 = vmatprep.mubr.f32.mxu0 0.0
    %446 = vmatmul.mubr.f32.gmra.mrb[0].mxu0 %v379
    %v447 = vpop.f32.mrb[0].mxu0
    %v448 = vadd.f32 0.0, %v447
    %v449 = vpop.f32.mrb[0].mxu0
    %450 = vdwg.mxu0
    %v451 = vadd.f32 %v129, %v448
    %453 = vrot.lane.b32.xlu0 %v291, 96
    %v454 = vpop.permute.xlu0 %453
    %v456 = vadd.f32 %v451, %v454
    %v457 = vxor.u32 %v456, 2147483648
    %v458 = vmul.f32 %v457, 1.442695
    %v459 = vpow.pop %v458
    %v460 = vadd.f32 %v459, 1.0
    %v461 = vrcp.pop %v460
    %v462 = vmul.f32 1.0, %v461
    %463 = vrot.lane.b32.xlu0 %v291, 32
    %v464 = vpop.permute.xlu0 %463
    %v466 = vmul.f32 %v462, %v464
    %468 = vrot.lane.b32.xlu0 %v466, 64
    %v469 = vpop.permute.xlu0 %468
    %v471 = vadd.f32 %v451, %v469
    %v472 = vtanh.pop %v471
    %v473 = vsub.f32 1.0, %v462
    %475 = vrot.lane.b32.xlu0 %v472, 96
    %v476 = vpop.permute.xlu0 %475
    %v478 = vmul.f32 %v473, %v476
    %v479 = vlaneseq
    %v480 = vshrl.u32 %v479, 7
    %v481 = vsub.s32 0, %v480
    %v482 = vrot.slane %v209, %v481
    %483 = vrot.lane.b32.xlu0 %v482, 32
    %v484 = vpop.permute.xlu0 %483
    %v486 = vmul.f32 %v462, %v484
    %v487 = vadd.f32 %v478, %v486
    %489 = vrot.lane.b32.xlu0 %v487, 96
    %v490 = vpop.permute.xlu0 %489
    %v491 = vsel %vm58, %v490, 0
    %493 = vmatprep.subr.mxu0 0.0
    %494 = vmatpush1.msra.mxu0 %v41
    %495 = vmatprep.subr.mxu0 0.0
    %496 = vmatpush1.msra.mxu0 %v42
    %497 = vmatprep.subr.mxu0 0.0
    %498 = vmatpush1.msra.mxu0 %v43
    %499 = vmatprep.subr.mxu0 0.0
    %500 = vmatpush1.msra.mxu0 %v44
    %501 = vmatprep.subr.mxu0 0.0
    %502 = vmatpush1.msra.mxu0 0.0
    %503 = vmatprep.subr.mxu0 0.0
    %504 = vmatpush1.msra.mxu0 0.0
    %505 = vmatprep.subr.mxu0 0.0
    %506 = vmatpush1.msra.mxu0 0.0
    %507 = vmatprep.subr.mxu0 0.0
    %508 = vmatpush1.msra.mxu0 0.0
    %509 = vmatprep.subr.mxu0 0.0
    %510 = vmatpush1.msra.mxu0 0.0
    %511 = vmatprep.subr.mxu0 0.0
    %512 = vmatpush1.msra.mxu0 0.0
    %513 = vmatprep.subr.mxu0 0.0
    %514 = vmatpush1.msra.mxu0 0.0
    %515 = vmatprep.subr.mxu0 0.0
    %516 = vmatpush1.msra.mxu0 0.0
    %517 = vmatprep.subr.mxu0 0.0
    %518 = vmatpush1.msra.mxu0 0.0
    %519 = vmatprep.subr.mxu0 0.0
    %520 = vmatpush1.msra.mxu0 0.0
    %521 = vmatprep.subr.mxu0 0.0
    %522 = vmatpush1.msra.mxu0 0.0
    %523 = vmatprep.subr.mxu0 0.0
    %524 = vmatpush1.msra.mxu0 0.0
    %525 = vmatprep.subr.mxu0 0.0
    %526 = vmatpush1.msra.mxu0 0.0
    %527 = vmatprep.subr.mxu0 0.0
    %528 = vmatpush1.msra.mxu0 0.0
    %529 = vmatprep.subr.mxu0 0.0
    %530 = vmatpush1.msra.mxu0 0.0
    %531 = vmatprep.subr.mxu0 0.0
    %532 = vmatpush1.msra.mxu0 0.0
    %533 = vmatprep.subr.mxu0 0.0
    %534 = vmatpush1.msra.mxu0 0.0
    %535 = vmatprep.subr.mxu0 0.0
    %536 = vmatpush1.msra.mxu0 0.0
    %537 = vmatprep.subr.mxu0 0.0
    %538 = vmatpush1.msra.mxu0 0.0
    %539 = vmatprep.subr.mxu0 0.0
    %540 = vmatpush1.msra.mxu0 0.0
    %541 = vmatprep.subr.mxu0 0.0
    %542 = vmatpush1.msra.mxu0 0.0
    %543 = vmatprep.subr.mxu0 0.0
    %544 = vmatpush1.msra.mxu0 0.0
    %545 = vmatprep.subr.mxu0 0.0
    %546 = vmatpush1.msra.mxu0 0.0
    %547 = vmatprep.subr.mxu0 0.0
    %548 = vmatpush1.msra.mxu0 0.0
    %549 = vmatprep.subr.mxu0 0.0
    %550 = vmatpush1.msra.mxu0 0.0
    %551 = vmatprep.subr.mxu0 0.0
    %552 = vmatpush1.msra.mxu0 0.0
    %553 = vmatprep.subr.mxu0 0.0
    %554 = vmatpush1.msra.mxu0 0.0
    %555 = vmatprep.subr.mxu0 0.0
    %556 = vmatpush1.msra.mxu0 0.0
    %557 = vmatprep.mubr.f32.mxu0 0.0
    %558 = vmatmul.mubr.f32.gmra.mrb[0].mxu0 %v491
    %v559 = vpop.f32.mrb[0].mxu0
    %v560 = vadd.f32 0.0, %v559
    %v561 = vpop.f32.mrb[0].mxu0
    %562 = vdwg.mxu0
    %v563 = vadd.f32 %v560, %v289
    %v565 = vsel %vm58, %v560, 0
    %567 = vmatprep.subr.mxu0 0.0
    %568 = vmatpush1.xpose.msra.mxu0 %v137
    %569 = vmatprep.subr.mxu0 0.0
    %570 = vmatpush1.xpose.msra.mxu0 0.0
    %571 = vmatprep.subr.mxu0 0.0
    %572 = vmatpush1.xpose.msra.mxu0 0.0
    %573 = vmatprep.subr.mxu0 0.0
    %574 = vmatpush1.xpose.msra.mxu0 0.0
    %575 = vmatprep.subr.mxu0 0.0
    %576 = vmatpush1.xpose.msra.mxu0 0.0
    %577 = vmatprep.subr.mxu0 0.0
    %578 = vmatpush1.xpose.msra.mxu0 0.0
    %579 = vmatprep.subr.mxu0 0.0
    %580 = vmatpush1.xpose.msra.mxu0 0.0
    %581 = vmatprep.subr.mxu0 0.0
    %582 = vmatpush1.xpose.msra.mxu0 0.0
    %583 = vmatprep.subr.mxu0 0.0
    %584 = vmatpush1.xpose.msra.mxu0 0.0
    %585 = vmatprep.subr.mxu0 0.0
    %586 = vmatpush1.xpose.msra.mxu0 0.0
    %587 = vmatprep.subr.mxu0 0.0
    %588 = vmatpush1.xpose.msra.mxu0 0.0
    %589 = vmatprep.subr.mxu0 0.0
    %590 = vmatpush1.xpose.msra.mxu0 0.0
    %591 = vmatprep.subr.mxu0 0.0
    %592 = vmatpush1.xpose.msra.mxu0 0.0
    %593 = vmatprep.subr.mxu0 0.0
    %594 = vmatpush1.xpose.msra.mxu0 0.0
    %595 = vmatprep.subr.mxu0 0.0
    %596 = vmatpush1.xpose.msra.mxu0 0.0
    %597 = vmatprep.subr.mxu0 0.0
    %598 = vmatpush1.xpose.msra.mxu0 0.0
    %599 = vmatprep.subr.mxu0 0.0
    %600 = vmatpush1.xpose.msra.mxu0 0.0
    %601 = vmatprep.subr.mxu0 0.0
    %602 = vmatpush1.xpose.msra.mxu0 0.0
    %603 = vmatprep.subr.mxu0 0.0
    %604 = vmatpush1.xpose.msra.mxu0 0.0
    %605 = vmatprep.subr.mxu0 0.0
    %606 = vmatpush1.xpose.msra.mxu0 0.0
    %607 = vmatprep.subr.mxu0 0.0
    %608 = vmatpush1.xpose.msra.mxu0 0.0
    %609 = vmatprep.subr.mxu0 0.0
    %610 = vmatpush1.xpose.msra.mxu0 0.0
    %611 = vmatprep.subr.mxu0 0.0
    %612 = vmatpush1.xpose.msra.mxu0 0.0
    %613 = vmatprep.subr.mxu0 0.0
    %614 = vmatpush1.xpose.msra.mxu0 0.0
    %615 = vmatprep.subr.mxu0 0.0
    %616 = vmatpush1.xpose.msra.mxu0 0.0
    %617 = vmatprep.subr.mxu0 0.0
    %618 = vmatpush1.xpose.msra.mxu0 0.0
    %619 = vmatprep.subr.mxu0 0.0
    %620 = vmatpush1.xpose.msra.mxu0 0.0
    %621 = vmatprep.subr.mxu0 0.0
    %622 = vmatpush1.xpose.msra.mxu0 0.0
    %623 = vmatprep.subr.mxu0 0.0
    %624 = vmatpush1.xpose.msra.mxu0 0.0
    %625 = vmatprep.subr.mxu0 0.0
    %626 = vmatpush1.xpose.msra.mxu0 0.0
    %627 = vmatprep.subr.mxu0 0.0
    %628 = vmatpush1.xpose.msra.mxu0 0.0
    %629 = vmatprep.subr.mxu0 0.0
    %630 = vmatpush1.xpose.msra.mxu0 0.0
    %631 = vmatprep.mubr.f32.mxu0 0.0
    %632 = vmatmul.mubr.f32.gmra.mrb[0].mxu0 %v565
    %v633 = vpop.f32.mrb[0].mxu0
    %v634 = vadd.f32 0.0, %v633
    %v635 = vpop.f32.mrb[0].mxu0
    %636 = vdwg.mxu0
    %v637 = vsel %vm365, %v634, -inf
    %638 = vmax.xlane.f32.xlu0 %v637
    %v639 = vpop.xlane.xlu0 %638
    %v640 = vsub.f32 %v634, %v639
    %v641 = vmul.f32 %v640, 1.442695
    %v642 = vpow.pop %v641
    %v643 = vsel %vm365, %v642, 0.0
    %644 = vadd.xlane.f32.xlu0 %v643
    %v645 = vpop.xlane.xlu0 %644
    %v646 = vrcp.pop %v645
    %v647 = vmul.f32 %v642, %v646
    %v649 = vsel %vm377, %v647, 0
    %651 = vmatprep.subr.mxu0 0.0
    %652 = vmatpush1.msra.mxu0 %v206
    %653 = vmatprep.subr.mxu0 0.0
    %654 = vmatpush1.msra.mxu0 0.0
    %655 = vmatprep.subr.mxu0 0.0
    %656 = vmatpush1.msra.mxu0 0.0
    %657 = vmatprep.subr.mxu0 0.0
    %658 = vmatpush1.msra.mxu0 0.0
    %659 = vmatprep.subr.mxu0 0.0
    %660 = vmatpush1.msra.mxu0 0.0
    %661 = vmatprep.subr.mxu0 0.0
    %662 = vmatpush1.msra.mxu0 0.0
    %663 = vmatprep.subr.mxu0 0.0
    %664 = vmatpush1.msra.mxu0 0.0
    %665 = vmatprep.subr.mxu0 0.0
    %666 = vmatpush1.msra.mxu0 0.0
    %667 = vmatprep.subr.mxu0 0.0
    %668 = vmatpush1.msra.mxu0 0.0
    %669 = vmatprep.subr.mxu0 0.0
    %670 = vmatpush1.msra.mxu0 0.0
    %671 = vmatprep.subr.mxu0 0.0
    %672 = vmatpush1.msra.mxu0 0.0
    %673 = vmatprep.subr.mxu0 0.0
    %674 = vmatpush1.msra.mxu0 0.0
    %675 = vmatprep.subr.mxu0 0.0
    %676 = vmatpush1.msra.mxu0 0.0
    %677 = vmatprep.subr.mxu0 0.0
    %678 = vmatpush1.msra.mxu0 0.0
    %679 = vmatprep.subr.mxu0 0.0
    %680 = vmatpush1.msra.mxu0 0.0
    %681 = vmatprep.subr.mxu0 0.0
    %682 = vmatpush1.msra.mxu0 0.0
    %683 = vmatprep.subr.mxu0 0.0
    %684 = vmatpush1.msra.mxu0 0.0
    %685 = vmatprep.subr.mxu0 0.0
    %686 = vmatpush1.msra.mxu0 0.0
    %687 = vmatprep.subr.mxu0 0.0
    %688 = vmatpush1.msra.mxu0 0.0
    %689 = vmatprep.subr.mxu0 0.0
    %690 = vmatpush1.msra.mxu0 0.0
    %691 = vmatprep.subr.mxu0 0.0
    %692 = vmatpush1.msra.mxu0 0.0
    %693 = vmatprep.subr.mxu0 0.0
    %694 = vmatpush1.msra.mxu0 0.0
    %695 = vmatprep.subr.mxu0 0.0
    %696 = vmatpush1.msra.mxu0 0.0
    %697 = vmatprep.subr.mxu0 0.0
    %698 = vmatpush1.msra.mxu0 0.0
    %699 = vmatprep.subr.mxu0 0.0
    %700 = vmatpush1.msra.mxu0 0.0
    %701 = vmatprep.subr.mxu0 0.0
    %702 = vmatpush1.msra.mxu0 0.0
    %703 = vmatprep.subr.mxu0 0.0
    %704 = vmatpush1.msra.mxu0 0.0
    %705 = vmatprep.subr.mxu0 0.0
    %706 = vmatpush1.msra.mxu0 0.0
    %707 = vmatprep.subr.mxu0 0.0
    %708 = vmatpush1.msra.mxu0 0.0
    %709 = vmatprep.subr.mxu0 0.0
    %710 = vmatpush1.msra.mxu0 0.0
    %711 = vmatprep.subr.mxu0 0.0
    %712 = vmatpush1.msra.mxu0 0.0
    %713 = vmatprep.subr.mxu0 0.0
    %714 = vmatpush1.msra.mxu0 0.0
    %715 = vmatprep.mubr.f32.mxu0 0.0
    %716 = vmatmul.mubr.f32.gmra.mrb[0].mxu0 %v649
    %v717 = vpop.f32.mrb[0].mxu0
    %v718 = vadd.f32 0.0, %v717
    %v719 = vpop.f32.mrb[0].mxu0
    %720 = vdwg.mxu0
    %v722 = vrot.slane %v718, 7
    %v724 = vadd.f32 %v129, %v722
    %v726 = vrot.slane %v563, 7
    %727 = vrot.lane.b32.xlu0 %v726, 96
    %v728 = vpop.permute.xlu0 %727
    %v730 = vadd.f32 %v724, %v728
    %v731 = vxor.u32 %v730, 2147483648
    %v732 = vmul.f32 %v731, 1.442695
    %v733 = vpow.pop %v732
    %v734 = vadd.f32 %v733, 1.0
    %v735 = vrcp.pop %v734
    %v736 = vmul.f32 1.0, %v735
    %737 = vrot.lane.b32.xlu0 %v726, 32
    %v738 = vpop.permute.xlu0 %737
    %v740 = vmul.f32 %v736, %v738
    %742 = vrot.lane.b32.xlu0 %v740, 64
    %v743 = vpop.permute.xlu0 %742
    %v745 = vadd.f32 %v724, %v743
    %v746 = vtanh.pop %v745
    %v747 = vsub.f32 1.0, %v736
    %749 = vrot.lane.b32.xlu0 %v746, 96
    %v750 = vpop.permute.xlu0 %749
    %v752 = vmul.f32 %v747, %v750
    %v753 = vrot.slane %v487, 7
    %v755 = vmul.f32 %v736, %v753
    %v756 = vadd.f32 %v752, %v755
    %v758 = vrot.slane %v756, 1
    %759 = vrot.lane.b32.xlu0 %v758, 96
    %v760 = vpop.permute.xlu0 %759
    %v761 = vsel %vm58, %v760, 0
    %763 = vmatprep.subr.mxu0 0.0
    %764 = vmatpush1.msra.mxu0 %v41
    %765 = vmatprep.subr.mxu0 0.0
    %766 = vmatpush1.msra.mxu0 %v42
    %767 = vmatprep.subr.mxu0 0.0
    %768 = vmatpush1.msra.mxu0 %v43
    %769 = vmatprep.subr.mxu0 0.0
    %770 = vmatpush1.msra.mxu0 %v44
    %771 = vmatprep.subr.mxu0 0.0
    %772 = vmatpush1.msra.mxu0 0.0
    %773 = vmatprep.subr.mxu0 0.0
    %774 = vmatpush1.msra.mxu0 0.0
    %775 = vmatprep.subr.mxu0 0.0
    %776 = vmatpush1.msra.mxu0 0.0
    %777 = vmatprep.subr.mxu0 0.0
    %778 = vmatpush1.msra.mxu0 0.0
    %779 = vmatprep.subr.mxu0 0.0
    %780 = vmatpush1.msra.mxu0 0.0
    %781 = vmatprep.subr.mxu0 0.0
    %782 = vmatpush1.msra.mxu0 0.0
    %783 = vmatprep.subr.mxu0 0.0
    %784 = vmatpush1.msra.mxu0 0.0
    %785 = vmatprep.subr.mxu0 0.0
    %786 = vmatpush1.msra.mxu0 0.0
    %787 = vmatprep.subr.mxu0 0.0
    %788 = vmatpush1.msra.mxu0 0.0
    %789 = vmatprep.subr.mxu0 0.0
    %790 = vmatpush1.msra.mxu0 0.0
    %791 = vmatprep.subr.mxu0 0.0
    %792 = vmatpush1.msra.mxu0 0.0
    %793 = vmatprep.subr.mxu0 0.0
    %794 = vmatpush1.msra.mxu0 0.0
    %795 = vmatprep.subr.mxu0 0.0
    %796 = vmatpush1.msra.mxu0 0.0
    %797 = vmatprep.subr.mxu0 0.0
    %798 = vmatpush1.msra.mxu0 0.0
    %799 = vmatprep.subr.mxu0 0.0
    %800 = vmatpush1.msra.mxu0 0.0
    %801 = vmatprep.subr.mxu0 0.0
    %802 = vmatpush1.msra.mxu0 0.0
    %803 = vmatprep.subr.mxu0 0.0
    %804 = vmatpush1.msra.mxu0 0.0
    %805 = vmatprep.subr.mxu0 0.0
    %806 = vmatpush1.msra.mxu0 0.0
    %807 = vmatprep.subr.mxu0 0.0
    %808 = vmatpush1.msra.mxu0 0.0
    %809 = vmatprep.subr.mxu0 0.0
    %810 = vmatpush1.msra.mxu0 0.0
    %811 = vmatprep.subr.mxu0 0.0
    %812 = vmatpush1.msra.mxu0 0.0
    %813 = vmatprep.subr.mxu0 0.0
    %814 = vmatpush1.msra.mxu0 0.0
    %815 = vmatprep.subr.mxu0 0.0
    %816 = vmatpush1.msra.mxu0 0.0
    %817 = vmatprep.subr.mxu0 0.0
    %818 = vmatpush1.msra.mxu0 0.0
    %819 = vmatprep.subr.mxu0 0.0
    %820 = vmatpush1.msra.mxu0 0.0
    %821 = vmatprep.subr.mxu0 0.0
    %822 = vmatpush1.msra.mxu0 0.0
    %823 = vmatprep.subr.mxu0 0.0
    %824 = vmatpush1.msra.mxu0 0.0
    %825 = vmatprep.subr.mxu0 0.0
    %826 = vmatpush1.msra.mxu0 0.0
    %827 = vmatprep.mubr.f32.mxu0 0.0
    %828 = vmatmul.mubr.f32.gmra.mrb[0].mxu0 %v761
    %v829 = vpop.f32.mrb[0].mxu0
    %v830 = vadd.f32 0.0, %v829
    %v831 = vpop.f32.mrb[0].mxu0
    %832 = vdwg.mxu0
    %v833 = vadd.f32 %v830, %v289
    %v835 = vsel %vm58, %v830, 0
    %837 = vmatprep.subr.mxu0 0.0
    %838 = vmatpush1.xpose.msra.mxu0 %v137
    %839 = vmatprep.subr.mxu0 0.0
    %840 = vmatpush1.xpose.msra.mxu0 0.0
    %841 = vmatprep.subr.mxu0 0.0
    %842 = vmatpush1.xpose.msra.mxu0 0.0
    %843 = vmatprep.subr.mxu0 0.0
    %844 = vmatpush1.xpose.msra.mxu0 0.0
    %845 = vmatprep.subr.mxu0 0.0
    %846 = vmatpush1.xpose.msra.mxu0 0.0
    %847 = vmatprep.subr.mxu0 0.0
    %848 = vmatpush1.xpose.msra.mxu0 0.0
    %849 = vmatprep.subr.mxu0 0.0
    %850 = vmatpush1.xpose.msra.mxu0 0.0
    %851 = vmatprep.subr.mxu0 0.0
    %852 = vmatpush1.xpose.msra.mxu0 0.0
    %853 = vmatprep.subr.mxu0 0.0
    %854 = vmatpush1.xpose.msra.mxu0 0.0
    %855 = vmatprep.subr.mxu0 0.0
    %856 = vmatpush1.xpose.msra.mxu0 0.0
    %857 = vmatprep.subr.mxu0 0.0
    %858 = vmatpush1.xpose.msra.mxu0 0.0
    %859 = vmatprep.subr.mxu0 0.0
    %860 = vmatpush1.xpose.msra.mxu0 0.0
    %861 = vmatprep.subr.mxu0 0.0
    %862 = vmatpush1.xpose.msra.mxu0 0.0
    %863 = vmatprep.subr.mxu0 0.0
    %864 = vmatpush1.xpose.msra.mxu0 0.0
    %865 = vmatprep.subr.mxu0 0.0
    %866 = vmatpush1.xpose.msra.mxu0 0.0
    %867 = vmatprep.subr.mxu0 0.0
    %868 = vmatpush1.xpose.msra.mxu0 0.0
    %869 = vmatprep.subr.mxu0 0.0
    %870 = vmatpush1.xpose.msra.mxu0 0.0
    %871 = vmatprep.subr.mxu0 0.0
    %872 = vmatpush1.xpose.msra.mxu0 0.0
    %873 = vmatprep.subr.mxu0 0.0
    %874 = vmatpush1.xpose.msra.mxu0 0.0
    %875 = vmatprep.subr.mxu0 0.0
    %876 = vmatpush1.xpose.msra.mxu0 0.0
    %877 = vmatprep.subr.mxu0 0.0
    %878 = vmatpush1.xpose.msra.mxu0 0.0
    %879 = vmatprep.subr.mxu0 0.0
    %880 = vmatpush1.xpose.msra.mxu0 0.0
    %881 = vmatprep.subr.mxu0 0.0
    %882 = vmatpush1.xpose.msra.mxu0 0.0
    %883 = vmatprep.subr.mxu0 0.0
    %884 = vmatpush1.xpose.msra.mxu0 0.0
    %885 = vmatprep.subr.mxu0 0.0
    %886 = vmatpush1.xpose.msra.mxu0 0.0
    %887 = vmatprep.subr.mxu0 0.0
    %888 = vmatpush1.xpose.msra.mxu0 0.0
    %889 = vmatprep.subr.mxu0 0.0
    %890 = vmatpush1.xpose.msra.mxu0 0.0
    %891 = vmatprep.subr.mxu0 0.0
    %892 = vmatpush1.xpose.msra.mxu0 0.0
    %893 = vmatprep.subr.mxu0 0.0
    %894 = vmatpush1.xpose.msra.mxu0 0.0
    %895 = vmatprep.subr.mxu0 0.0
    %896 = vmatpush1.xpose.msra.mxu0 0.0
    %897 = vmatprep.subr.mxu0 0.0
    %898 = vmatpush1.xpose.msra.mxu0 0.0
    %899 = vmatprep.subr.mxu0 0.0
    %900 = vmatpush1.xpose.msra.mxu0 0.0
    %901 = vmatprep.mubr.f32.mxu0 0.0
    %902 = vmatmul.mubr.f32.gmra.mrb[0].mxu0 %v835
    %v903 = vpop.f32.mrb[0].mxu0
    %v904 = vadd.f32 0.0, %v903
    %v905 = vpop.f32.mrb[0].mxu0
    %906 = vdwg.mxu0
    %v907 = vsel %vm365, %v904, -inf
    %908 = vmax.xlane.f32.xlu0 %v907
    %v909 = vpop.xlane.xlu0 %908
    %v910 = vsub.f32 %v904, %v909
    %v911 = vmul.f32 %v910, 1.442695
    %v912 = vpow.pop %v911
    %v913 = vsel %vm365, %v912, 0.0
    %914 = vadd.xlane.f32.xlu0 %v913
    %v915 = vpop.xlane.xlu0 %914
    %v916 = vrcp.pop %v915
    %v917 = vmul.f32 %v912, %v916
    %v919 = vsel %vm377, %v917, 0
    %921 = vmatprep.subr.mxu0 0.0
    %922 = vmatpush1.msra.mxu0 %v206
    %923 = vmatprep.subr.mxu0 0.0
    %924 = vmatpush1.msra.mxu0 0.0
    %925 = vmatprep.subr.mxu0 0.0
    %926 = vmatpush1.msra.mxu0 0.0
    %927 = vmatprep.subr.mxu0 0.0
    %928 = vmatpush1.msra.mxu0 0.0
    %929 = vmatprep.subr.mxu0 0.0
    %930 = vmatpush1.msra.mxu0 0.0
    %931 = vmatprep.subr.mxu0 0.0
    %932 = vmatpush1.msra.mxu0 0.0
    %933 = vmatprep.subr.mxu0 0.0
    %934 = vmatpush1.msra.mxu0 0.0
    %935 = vmatprep.subr.mxu0 0.0
    %936 = vmatpush1.msra.mxu0 0.0
    %937 = vmatprep.subr.mxu0 0.0
    %938 = vmatpush1.msra.mxu0 0.0
    %939 = vmatprep.subr.mxu0 0.0
    %940 = vmatpush1.msra.mxu0 0.0
    %941 = vmatprep.subr.mxu0 0.0
    %942 = vmatpush1.msra.mxu0 0.0
    %943 = vmatprep.subr.mxu0 0.0
    %944 = vmatpush1.msra.mxu0 0.0
    %945 = vmatprep.subr.mxu0 0.0
    %946 = vmatpush1.msra.mxu0 0.0
    %947 = vmatprep.subr.mxu0 0.0
    %948 = vmatpush1.msra.mxu0 0.0
    %949 = vmatprep.subr.mxu0 0.0
    %950 = vmatpush1.msra.mxu0 0.0
    %951 = vmatprep.subr.mxu0 0.0
    %952 = vmatpush1.msra.mxu0 0.0
    %953 = vmatprep.subr.mxu0 0.0
    %954 = vmatpush1.msra.mxu0 0.0
    %955 = vmatprep.subr.mxu0 0.0
    %956 = vmatpush1.msra.mxu0 0.0
    %957 = vmatprep.subr.mxu0 0.0
    %958 = vmatpush1.msra.mxu0 0.0
    %959 = vmatprep.subr.mxu0 0.0
    %960 = vmatpush1.msra.mxu0 0.0
    %961 = vmatprep.subr.mxu0 0.0
    %962 = vmatpush1.msra.mxu0 0.0
    %963 = vmatprep.subr.mxu0 0.0
    %964 = vmatpush1.msra.mxu0 0.0
    %965 = vmatprep.subr.mxu0 0.0
    %966 = vmatpush1.msra.mxu0 0.0
    %967 = vmatprep.subr.mxu0 0.0
    %968 = vmatpush1.msra.mxu0 0.0
    %969 = vmatprep.subr.mxu0 0.0
    %970 = vmatpush1.msra.mxu0 0.0
    %971 = vmatprep.subr.mxu0 0.0
    %972 = vmatpush1.msra.mxu0 0.0
    %973 = vmatprep.subr.mxu0 0.0
    %974 = vmatpush1.msra.mxu0 0.0
    %975 = vmatprep.subr.mxu0 0.0
    %976 = vmatpush1.msra.mxu0 0.0
    %977 = vmatprep.subr.mxu0 0.0
    %978 = vmatpush1.msra.mxu0 0.0
    %979 = vmatprep.subr.mxu0 0.0
    %980 = vmatpush1.msra.mxu0 0.0
    %981 = vmatprep.subr.mxu0 0.0
    %982 = vmatpush1.msra.mxu0 0.0
    %983 = vmatprep.subr.mxu0 0.0
    %984 = vmatpush1.msra.mxu0 0.0
    %985 = vmatprep.mubr.f32.mxu0 0.0
    %986 = vmatmul.mubr.f32.gmra.mrb[0].mxu0 %v919
    %v987 = vpop.f32.mrb[0].mxu0
    %v988 = vadd.f32 0.0, %v987
    %v989 = vpop.f32.mrb[0].mxu0
    %990 = vdwg.mxu0
    %v992 = vrot.slane %v988, 6
    %v994 = vadd.f32 %v129, %v992
    %v996 = vrot.slane %v833, 6
    %997 = vrot.lane.b32.xlu0 %v996, 96
    %v998 = vpop.permute.xlu0 %997
    %v1000 = vadd.f32 %v994, %v998
    %v1001 = vxor.u32 %v1000, 2147483648
    %v1002 = vmul.f32 %v1001, 1.442695
    %v1003 = vpow.pop %v1002
    %v1004 = vadd.f32 %v1003, 1.0
    %v1005 = vrcp.pop %v1004
    %v1006 = vmul.f32 1.0, %v1005
    %1007 = vrot.lane.b32.xlu0 %v996, 32
    %v1008 = vpop.permute.xlu0 %1007
    %v1010 = vmul.f32 %v1006, %v1008
    %1012 = vrot.lane.b32.xlu0 %v1010, 64
    %v1013 = vpop.permute.xlu0 %1012
    %v1015 = vadd.f32 %v994, %v1013
    %v1016 = vtanh.pop %v1015
    %v1017 = vsub.f32 1.0, %v1006
    %1019 = vrot.lane.b32.xlu0 %v1016, 96
    %v1020 = vpop.permute.xlu0 %1019
    %v1022 = vmul.f32 %v1017, %v1020
    %v1023 = vrot.slane %v756, 7
    %v1025 = vmul.f32 %v1006, %v1023
    %v1026 = vadd.f32 %v1022, %v1025
    %v1028 = vrot.slane %v1026, 2
    %1029 = vrot.lane.b32.xlu0 %v1028, 96
    %v1030 = vpop.permute.xlu0 %1029
    %v1031 = vsel %vm58, %v1030, 0
    %1033 = vmatprep.subr.mxu0 0.0
    %1034 = vmatpush1.msra.mxu0 %v41
    %1035 = vmatprep.subr.mxu0 0.0
    %1036 = vmatpush1.msra.mxu0 %v42
    %1037 = vmatprep.subr.mxu0 0.0
    %1038 = vmatpush1.msra.mxu0 %v43
    %1039 = vmatprep.subr.mxu0 0.0
    %1040 = vmatpush1.msra.mxu0 %v44
    %1041 = vmatprep.subr.mxu0 0.0
    %1042 = vmatpush1.msra.mxu0 0.0
    %1043 = vmatprep.subr.mxu0 0.0
    %1044 = vmatpush1.msra.mxu0 0.0
    %1045 = vmatprep.subr.mxu0 0.0
    %1046 = vmatpush1.msra.mxu0 0.0
    %1047 = vmatprep.subr.mxu0 0.0
    %1048 = vmatpush1.msra.mxu0 0.0
    %1049 = vmatprep.subr.mxu0 0.0
    %1050 = vmatpush1.msra.mxu0 0.0
    %1051 = vmatprep.subr.mxu0 0.0
    %1052 = vmatpush1.msra.mxu0 0.0
    %1053 = vmatprep.subr.mxu0 0.0
    %1054 = vmatpush1.msra.mxu0 0.0
    %1055 = vmatprep.subr.mxu0 0.0
    %1056 = vmatpush1.msra.mxu0 0.0
    %1057 = vmatprep.subr.mxu0 0.0
    %1058 = vmatpush1.msra.mxu0 0.0
    %1059 = vmatprep.subr.mxu0 0.0
    %1060 = vmatpush1.msra.mxu0 0.0
    %1061 = vmatprep.subr.mxu0 0.0
    %1062 = vmatpush1.msra.mxu0 0.0
    %1063 = vmatprep.subr.mxu0 0.0
    %1064 = vmatpush1.msra.mxu0 0.0
    %1065 = vmatprep.subr.mxu0 0.0
    %1066 = vmatpush1.msra.mxu0 0.0
    %1067 = vmatprep.subr.mxu0 0.0
    %1068 = vmatpush1.msra.mxu0 0.0
    %1069 = vmatprep.subr.mxu0 0.0
    %1070 = vmatpush1.msra.mxu0 0.0
    %1071 = vmatprep.subr.mxu0 0.0
    %1072 = vmatpush1.msra.mxu0 0.0
    %1073 = vmatprep.subr.mxu0 0.0
    %1074 = vmatpush1.msra.mxu0 0.0
    %1075 = vmatprep.subr.mxu0 0.0
    %1076 = vmatpush1.msra.mxu0 0.0
    %1077 = vmatprep.subr.mxu0 0.0
    %1078 = vmatpush1.msra.mxu0 0.0
    %1079 = vmatprep.subr.mxu0 0.0
    %1080 = vmatpush1.msra.mxu0 0.0
    %1081 = vmatprep.subr.mxu0 0.0
    %1082 = vmatpush1.msra.mxu0 0.0
    %1083 = vmatprep.subr.mxu0 0.0
    %1084 = vmatpush1.msra.mxu0 0.0
    %1085 = vmatprep.subr.mxu0 0.0
    %1086 = vmatpush1.msra.mxu0 0.0
    %1087 = vmatprep.subr.mxu0 0.0
    %1088 = vmatpush1.msra.mxu0 0.0
    %1089 = vmatprep.subr.mxu0 0.0
    %1090 = vmatpush1.msra.mxu0 0.0
    %1091 = vmatprep.subr.mxu0 0.0
    %1092 = vmatpush1.msra.mxu0 0.0
    %1093 = vmatprep.subr.mxu0 0.0
    %1094 = vmatpush1.msra.mxu0 0.0
    %1095 = vmatprep.subr.mxu0 0.0
    %1096 = vmatpush1.msra.mxu0 0.0
    %1097 = vmatprep.mubr.f32.mxu0 0.0
    %1098 = vmatmul.mubr.f32.gmra.mrb[0].mxu0 %v1031
    %v1099 = vpop.f32.mrb[0].mxu0
    %v1100 = vadd.f32 0.0, %v1099
    %v1101 = vpop.f32.mrb[0].mxu0
    %1102 = vdwg.mxu0
    %v1103 = vadd.f32 %v1100, %v289
    %v1105 = vsel %vm58, %v1100, 0
    %1107 = vmatprep.subr.mxu0 0.0
    %1108 = vmatpush1.xpose.msra.mxu0 %v137
    %1109 = vmatprep.subr.mxu0 0.0
    %1110 = vmatpush1.xpose.msra.mxu0 0.0
    %1111 = vmatprep.subr.mxu0 0.0
    %1112 = vmatpush1.xpose.msra.mxu0 0.0
    %1113 = vmatprep.subr.mxu0 0.0
    %1114 = vmatpush1.xpose.msra.mxu0 0.0
    %1115 = vmatprep.subr.mxu0 0.0
    %1116 = vmatpush1.xpose.msra.mxu0 0.0
    %1117 = vmatprep.subr.mxu0 0.0
    %1118 = vmatpush1.xpose.msra.mxu0 0.0
    %1119 = vmatprep.subr.mxu0 0.0
    %1120 = vmatpush1.xpose.msra.mxu0 0.0
    %1121 = vmatprep.subr.mxu0 0.0
    %1122 = vmatpush1.xpose.msra.mxu0 0.0
    %1123 = vmatprep.subr.mxu0 0.0
    %1124 = vmatpush1.xpose.msra.mxu0 0.0
    %1125 = vmatprep.subr.mxu0 0.0
    %1126 = vmatpush1.xpose.msra.mxu0 0.0
    %1127 = vmatprep.subr.mxu0 0.0
    %1128 = vmatpush1.xpose.msra.mxu0 0.0
    %1129 = vmatprep.subr.mxu0 0.0
    %1130 = vmatpush1.xpose.msra.mxu0 0.0
    %1131 = vmatprep.subr.mxu0 0.0
    %1132 = vmatpush1.xpose.msra.mxu0 0.0
    %1133 = vmatprep.subr.mxu0 0.0
    %1134 = vmatpush1.xpose.msra.mxu0 0.0
    %1135 = vmatprep.subr.mxu0 0.0
    %1136 = vmatpush1.xpose.msra.mxu0 0.0
    %1137 = vmatprep.subr.mxu0 0.0
    %1138 = vmatpush1.xpose.msra.mxu0 0.0
    %1139 = vmatprep.subr.mxu0 0.0
    %1140 = vmatpush1.xpose.msra.mxu0 0.0
    %1141 = vmatprep.subr.mxu0 0.0
    %1142 = vmatpush1.xpose.msra.mxu0 0.0
    %1143 = vmatprep.subr.mxu0 0.0
    %1144 = vmatpush1.xpose.msra.mxu0 0.0
    %1145 = vmatprep.subr.mxu0 0.0
    %1146 = vmatpush1.xpose.msra.mxu0 0.0
    %1147 = vmatprep.subr.mxu0 0.0
    %1148 = vmatpush1.xpose.msra.mxu0 0.0
    %1149 = vmatprep.subr.mxu0 0.0
    %1150 = vmatpush1.xpose.msra.mxu0 0.0
    %1151 = vmatprep.subr.mxu0 0.0
    %1152 = vmatpush1.xpose.msra.mxu0 0.0
    %1153 = vmatprep.subr.mxu0 0.0
    %1154 = vmatpush1.xpose.msra.mxu0 0.0
    %1155 = vmatprep.subr.mxu0 0.0
    %1156 = vmatpush1.xpose.msra.mxu0 0.0
    %1157 = vmatprep.subr.mxu0 0.0
    %1158 = vmatpush1.xpose.msra.mxu0 0.0
    %1159 = vmatprep.subr.mxu0 0.0
    %1160 = vmatpush1.xpose.msra.mxu0 0.0
    %1161 = vmatprep.subr.mxu0 0.0
    %1162 = vmatpush1.xpose.msra.mxu0 0.0
    %1163 = vmatprep.subr.mxu0 0.0
    %1164 = vmatpush1.xpose.msra.mxu0 0.0
    %1165 = vmatprep.subr.mxu0 0.0
    %1166 = vmatpush1.xpose.msra.mxu0 0.0
    %1167 = vmatprep.subr.mxu0 0.0
    %1168 = vmatpush1.xpose.msra.mxu0 0.0
    %1169 = vmatprep.subr.mxu0 0.0
    %1170 = vmatpush1.xpose.msra.mxu0 0.0
    %1171 = vmatprep.mubr.f32.mxu0 0.0
    %1172 = vmatmul.mubr.f32.gmra.mrb[0].mxu0 %v1105
    %v1173 = vpop.f32.mrb[0].mxu0
    %v1174 = vadd.f32 0.0, %v1173
    %v1175 = vpop.f32.mrb[0].mxu0
    %1176 = vdwg.mxu0
    %v1177 = vsel %vm365, %v1174, -inf
    %1178 = vmax.xlane.f32.xlu0 %v1177
    %v1179 = vpop.xlane.xlu0 %1178
    %v1180 = vsub.f32 %v1174, %v1179
    %v1181 = vmul.f32 %v1180, 1.442695
    %v1182 = vpow.pop %v1181
    %v1183 = vsel %vm365, %v1182, 0.0
    %1184 = vadd.xlane.f32.xlu0 %v1183
    %v1185 = vpop.xlane.xlu0 %1184
    %v1186 = vrcp.pop %v1185
    %v1187 = vmul.f32 %v1182, %v1186
    %v1189 = vsel %vm377, %v1187, 0
    %1191 = vmatprep.subr.mxu0 0.0
    %1192 = vmatpush1.msra.mxu0 %v206
    %1193 = vmatprep.subr.mxu0 0.0
    %1194 = vmatpush1.msra.mxu0 0.0
    %1195 = vmatprep.subr.mxu0 0.0
    %1196 = vmatpush1.msra.mxu0 0.0
    %1197 = vmatprep.subr.mxu0 0.0
    %1198 = vmatpush1.msra.mxu0 0.0
    %1199 = vmatprep.subr.mxu0 0.0
    %1200 = vmatpush1.msra.mxu0 0.0
    %1201 = vmatprep.subr.mxu0 0.0
    %1202 = vmatpush1.msra.mxu0 0.0
    %1203 = vmatprep.subr.mxu0 0.0
    %1204 = vmatpush1.msra.mxu0 0.0
    %1205 = vmatprep.subr.mxu0 0.0
    %1206 = vmatpush1.msra.mxu0 0.0
    %1207 = vmatprep.subr.mxu0 0.0
    %1208 = vmatpush1.msra.mxu0 0.0
    %1209 = vmatprep.subr.mxu0 0.0
    %1210 = vmatpush1.msra.mxu0 0.0
    %1211 = vmatprep.subr.mxu0 0.0
    %1212 = vmatpush1.msra.mxu0 0.0
    %1213 = vmatprep.subr.mxu0 0.0
    %1214 = vmatpush1.msra.mxu0 0.0
    %1215 = vmatprep.subr.mxu0 0.0
    %1216 = vmatpush1.msra.mxu0 0.0
    %1217 = vmatprep.subr.mxu0 0.0
    %1218 = vmatpush1.msra.mxu0 0.0
    %1219 = vmatprep.subr.mxu0 0.0
    %1220 = vmatpush1.msra.mxu0 0.0
    %1221 = vmatprep.subr.mxu0 0.0
    %1222 = vmatpush1.msra.mxu0 0.0
    %1223 = vmatprep.subr.mxu0 0.0
    %1224 = vmatpush1.msra.mxu0 0.0
    %1225 = vmatprep.subr.mxu0 0.0
    %1226 = vmatpush1.msra.mxu0 0.0
    %1227 = vmatprep.subr.mxu0 0.0
    %1228 = vmatpush1.msra.mxu0 0.0
    %1229 = vmatprep.subr.mxu0 0.0
    %1230 = vmatpush1.msra.mxu0 0.0
    %1231 = vmatprep.subr.mxu0 0.0
    %1232 = vmatpush1.msra.mxu0 0.0
    %1233 = vmatprep.subr.mxu0 0.0
    %1234 = vmatpush1.msra.mxu0 0.0
    %1235 = vmatprep.subr.mxu0 0.0
    %1236 = vmatpush1.msra.mxu0 0.0
    %1237 = vmatprep.subr.mxu0 0.0
    %1238 = vmatpush1.msra.mxu0 0.0
    %1239 = vmatprep.subr.mxu0 0.0
    %1240 = vmatpush1.msra.mxu0 0.0
    %1241 = vmatprep.subr.mxu0 0.0
    %1242 = vmatpush1.msra.mxu0 0.0
    %1243 = vmatprep.subr.mxu0 0.0
    %1244 = vmatpush1.msra.mxu0 0.0
    %1245 = vmatprep.subr.mxu0 0.0
    %1246 = vmatpush1.msra.mxu0 0.0
    %1247 = vmatprep.subr.mxu0 0.0
    %1248 = vmatpush1.msra.mxu0 0.0
    %1249 = vmatprep.subr.mxu0 0.0
    %1250 = vmatpush1.msra.mxu0 0.0
    %1251 = vmatprep.subr.mxu0 0.0
    %1252 = vmatpush1.msra.mxu0 0.0
    %1253 = vmatprep.subr.mxu0 0.0
    %1254 = vmatpush1.msra.mxu0 0.0
    %1255 = vmatprep.mubr.f32.mxu0 0.0
    %1256 = vmatmul.mubr.f32.gmra.mrb[0].mxu0 %v1189
    %v1257 = vpop.f32.mrb[0].mxu0
    %v1258 = vadd.f32 0.0, %v1257
    %v1259 = vpop.f32.mrb[0].mxu0
    %1260 = vdwg.mxu0
    %v1262 = vrot.slane %v1258, 5
    %v1264 = vadd.f32 %v129, %v1262
    %v1266 = vrot.slane %v1103, 5
    %1267 = vrot.lane.b32.xlu0 %v1266, 96
    %v1268 = vpop.permute.xlu0 %1267
    %v1270 = vadd.f32 %v1264, %v1268
    %v1271 = vxor.u32 %v1270, 2147483648
    %v1272 = vmul.f32 %v1271, 1.442695
    %v1273 = vpow.pop %v1272
    %v1274 = vadd.f32 %v1273, 1.0
    %v1275 = vrcp.pop %v1274
    %v1276 = vmul.f32 1.0, %v1275
    %1277 = vrot.lane.b32.xlu0 %v1266, 32
    %v1278 = vpop.permute.xlu0 %1277
    %v1280 = vmul.f32 %v1276, %v1278
    %1282 = vrot.lane.b32.xlu0 %v1280, 64
    %v1283 = vpop.permute.xlu0 %1282
    %v1285 = vadd.f32 %v1264, %v1283
    %v1286 = vtanh.pop %v1285
    %v1287 = vsub.f32 1.0, %v1276
    %1289 = vrot.lane.b32.xlu0 %v1286, 96
    %v1290 = vpop.permute.xlu0 %1289
    %v1292 = vmul.f32 %v1287, %v1290
    %v1293 = vrot.slane %v1026, 7
    %v1295 = vmul.f32 %v1276, %v1293
    %v1296 = vadd.f32 %v1292, %v1295
    %v1297 = vrot.slane %v647, 7
    %v1299 = vrot.slane %v917, 6
    %v1301 = vrot.slane %v1187, 5
    %vm1303 = vcmask 1040384
    %v1304 = vsel %vm1303, %v376, %v1297
    %vm1305 = vcmask 1041408
    %v1306 = vsel %vm1305, %v1304, %v1299
    %vm1307 = vcmask 1042432
    %v1308 = vsel %vm1307, %v1306, %v1301
    %vm1309 = vcmask 60416
    %1310 = vst.msk [vmem:[#allocation6] sm:$0xf] %vm1309, %v1308
    %1312 = vrot.lane.b32.xlu0 %v1296, 96
    %v1313 = vpop.permute.xlu0 %1312
    %vm1315 = vcmask 257027
    %1316 = vst.msk [vmem:[#allocation4 - $0x3] sm:$0x8] %vm1315, %v1313
    %v1317 = vsel %vm1303, %v487, %v756
    %v1318 = vsel %vm1305, %v1317, %v1026
    %v1319 = vsel %vm1307, %v1318, %v1296
    %v1320 = vld [vmem:[%s8] sm:$0xff]
    %v1321 = vld [vmem:[%s8 + $0x8] sm:$0xff]
    %v1322 = vld [vmem:[%s8 + $0x10] sm:$0xff]
    %v1323 = vld [vmem:[%s8 + $0x18] sm:$0xff]
    %v1324 = vld [vmem:[%s9] sm:$0x1]
    %v1326 = vlaneseq
    %v1327 = vshrl.u32 %v1326, 7
    %v1328 = vsub.s32 0, %v1327
    %v1329 = vrot.slane %v1324, %v1328
    %1332 = vrot.lane.b32.xlu0 %v1319, 96
    %v1333 = vpop.permute.xlu0 %1332
    %v1334 = vsel %vm58, %v1333, 0
    %1336 = vmatprep.subr.mxu0 0.0
    %1337 = vmatpush1.msra.mxu0 %v1320
    %1338 = vmatprep.subr.mxu0 0.0
    %1339 = vmatpush1.msra.mxu0 %v1321
    %1340 = vmatprep.subr.mxu0 0.0
    %1341 = vmatpush1.msra.mxu0 %v1322
    %1342 = vmatprep.subr.mxu0 0.0
    %1343 = vmatpush1.msra.mxu0 %v1323
    %1344 = vmatprep.subr.mxu0 0.0
    %1345 = vmatpush1.msra.mxu0 0.0
    %1346 = vmatprep.subr.mxu0 0.0
    %1347 = vmatpush1.msra.mxu0 0.0
    %1348 = vmatprep.subr.mxu0 0.0
    %1349 = vmatpush1.msra.mxu0 0.0
    %1350 = vmatprep.subr.mxu0 0.0
    %1351 = vmatpush1.msra.mxu0 0.0
    %1352 = vmatprep.subr.mxu0 0.0
    %1353 = vmatpush1.msra.mxu0 0.0
    %1354 = vmatprep.subr.mxu0 0.0
    %1355 = vmatpush1.msra.mxu0 0.0
    %1356 = vmatprep.subr.mxu0 0.0
    %1357 = vmatpush1.msra.mxu0 0.0
    %1358 = vmatprep.subr.mxu0 0.0
    %1359 = vmatpush1.msra.mxu0 0.0
    %1360 = vmatprep.subr.mxu0 0.0
    %1361 = vmatpush1.msra.mxu0 0.0
    %1362 = vmatprep.subr.mxu0 0.0
    %1363 = vmatpush1.msra.mxu0 0.0
    %1364 = vmatprep.subr.mxu0 0.0
    %1365 = vmatpush1.msra.mxu0 0.0
    %1366 = vmatprep.subr.mxu0 0.0
    %1367 = vmatpush1.msra.mxu0 0.0
    %1368 = vmatprep.subr.mxu0 0.0
    %1369 = vmatpush1.msra.mxu0 0.0
    %1370 = vmatprep.subr.mxu0 0.0
    %1371 = vmatpush1.msra.mxu0 0.0
    %1372 = vmatprep.subr.mxu0 0.0
    %1373 = vmatpush1.msra.mxu0 0.0
    %1374 = vmatprep.subr.mxu0 0.0
    %1375 = vmatpush1.msra.mxu0 0.0
    %1376 = vmatprep.subr.mxu0 0.0
    %1377 = vmatpush1.msra.mxu0 0.0
    %1378 = vmatprep.subr.mxu0 0.0
    %1379 = vmatpush1.msra.mxu0 0.0
    %1380 = vmatprep.subr.mxu0 0.0
    %1381 = vmatpush1.msra.mxu0 0.0
    %1382 = vmatprep.subr.mxu0 0.0
    %1383 = vmatpush1.msra.mxu0 0.0
    %1384 = vmatprep.subr.mxu0 0.0
    %1385 = vmatpush1.msra.mxu0 0.0
    %1386 = vmatprep.subr.mxu0 0.0
    %1387 = vmatpush1.msra.mxu0 0.0
    %1388 = vmatprep.subr.mxu0 0.0
    %1389 = vmatpush1.msra.mxu0 0.0
    %1390 = vmatprep.subr.mxu0 0.0
    %1391 = vmatpush1.msra.mxu0 0.0
    %1392 = vmatprep.subr.mxu0 0.0
    %1393 = vmatpush1.msra.mxu0 0.0
    %1394 = vmatprep.subr.mxu0 0.0
    %1395 = vmatpush1.msra.mxu0 0.0
    %1396 = vmatprep.subr.mxu0 0.0
    %1397 = vmatpush1.msra.mxu0 0.0
    %1398 = vmatprep.subr.mxu0 0.0
    %1399 = vmatpush1.msra.mxu0 0.0
    %1400 = vmatprep.mubr.f32.mxu0 0.0
    %1401 = vmatmul.mubr.f32.gmra.mrb[0].mxu0 %v1334
    %v1402 = vpop.f32.mrb[0].mxu0
    %v1403 = vadd.f32 %v1329, %v1402
    %v1404 = vpop.f32.mrb[0].mxu0
    %1405 = vdwg.mxu0
    %vm1406 = vcmask 1043456
    %v1407 = vsel %vm1406, %v1403, -inf
    %1408 = vmax.xlane.f32.xlu0 %v1407
    %v1409 = vpop.xlane.xlu0 %1408
    %v1410 = vsub.f32 %v1403, %v1409
    %v1411 = vmul.f32 %v1410, 1.442695
    %v1412 = vpow.pop %v1411
    %v1413 = vsel %vm1406, %v1412, 0.0
    %1414 = vadd.xlane.f32.xlu0 %v1413
    %v1415 = vpop.xlane.xlu0 %1414
    %v1416 = vlog2.pop %v1415
    %v1417 = vmul.f32 %v1416, 0.6931472
    %v1418 = vsub.f32 %v1410, %v1417
    %1419 = vst [vmem:[#allocation2] sm:$0xf] %v1418
    // Predicated region
    $region42: #{bahdanau_attn_decoder_decode.1} parent=1 // pred_check
      _
    $region43: #{bahdanau_attn_decoder_decode.1} parent=1 // pred_check_branch
      %1421 = sbr.rel (0) target = $region45
    $region44: #{bahdanau_attn_decoder_decode.1} parent=1 // pred_region
      %s1423 = ssub.s32 64, 64
      %1424 = vsyncadd [#allocation3], %s1423
      %s1426 = sshll.u32 [#allocation2], 4
      %s1427 = int_to_ptr.vmem [resolvable:$true] %s1426
      %1429 = dma.vmem_to_hbm [thread:$0]  %s1427, 64, %s10, [#allocation3]
    $region45: #{bahdanau_attn_decoder_decode.1} parent=1 // pred_fallthru
      _
    // Predicated region
    $region46: #{bahdanau_attn_decoder_decode.1} parent=1 // pred_check
      _
    $region47: #{bahdanau_attn_decoder_decode.1} parent=1 // pred_check_branch
      %1431 = sbr.rel (0) target = $region49
    $region48: #{bahdanau_attn_decoder_decode.1} parent=1 // pred_region
      %s1433 = ssub.s32 16, 16
      %1434 = vsyncadd [#allocation5], %s1433
      %s1436 = sshll.u32 [#allocation4], 4
      %s1437 = int_to_ptr.vmem [resolvable:$true] %s1436
      %1439 = dma.vmem_to_hbm [thread:$0]  %s1437, 16, %s11, [#allocation5]
    $region49: #{bahdanau_attn_decoder_decode.1} parent=1 // pred_fallthru
      _
    // Predicated region
    $region50: #{bahdanau_attn_decoder_decode.1} parent=1 // pred_check
      _
    $region51: #{bahdanau_attn_decoder_decode.1} parent=1 // pred_check_branch
      %1441 = sbr.rel (0) target = $region53
    $region52: #{bahdanau_attn_decoder_decode.1} parent=1 // pred_region
      %s1443 = ssub.s32 64, 64
      %1444 = vsyncadd [#allocation5], %s1443
      %s1446 = sshll.u32 [#allocation6], 4
      %s1447 = int_to_ptr.vmem [resolvable:$true] %s1446
      %1449 = dma.vmem_to_hbm [thread:$0]  %s1447, 64, %s12, [#allocation5]
    $region53: #{bahdanau_attn_decoder_decode.1} parent=1 // pred_fallthru
      _
    // Predicated region
    $region54: #{bahdanau_attn_decoder_decode.1} parent=1 // pred_check
      _
    $region55: #{bahdanau_attn_decoder_decode.1} parent=1 // pred_check_branch
      %1451 = sbr.rel (0) target = $region57
    $region56: #{bahdanau_attn_decoder_decode.1} parent=1 // pred_region
      %1452 = dma.done [#allocation3], 64
    $region57: #{bahdanau_attn_decoder_decode.1} parent=1 // pred_fallthru
      _
    // Predicated region
    $region58: #{bahdanau_attn_decoder_decode.1} parent=1 // pred_check
      _
    $region59: #{bahdanau_attn_decoder_decode.1} parent=1 // pred_check_branch
      %1454 = sbr.rel (0) target = $region61
    $region60: #{bahdanau_attn_decoder_decode.1} parent=1 // pred_region
      %1455 = dma.done [#allocation5], 16
    $region61: #{bahdanau_attn_decoder_decode.1} parent=1 // pred_fallthru
      _
    // Predicated region
    $region62: #{bahdanau_attn_decoder_decode.1} parent=1 // pred_check
      _
    $region63: #{bahdanau_attn_decoder_decode.1} parent=1 // pred_check_branch
      %1457 = sbr.rel (0) target = $region65
    $region64: #{bahdanau_attn_decoder_decode.1} parent=1 // pred_region
      %1458 = dma.done [#allocation5], 64
    $region65: #{bahdanau_attn_decoder_decode.1} parent=1 // pred_fallthru
      _
    %1459 = vsyncpa [#allocation3], 1
    %1460 = vsyncpa [#allocation5], 1

</llo_original>
